<compile_context>
chip_gen: v7x
topology: tpu7x:2x2x1
jax: 0.10.0
libtpu: 0.0.40
codegen_flags: <defaults>
</compile_context>

<pallas_src>
import functools

import jax
import jax.numpy as jnp
from jax.experimental import pallas as pl
from jax.experimental.pallas import tpu as pltpu

# ---- model hyper-parameters (small, consistent with the module's __init__) ----
N_FEAT = 8       # n_features
N_HID = 32       # n_hidden
N_CLS = 4        # n_classes
K = 4            # propagation depth of Prop
DROPOUT = 0.5    # unused at inference (identity)

# ---- demo graph size / tiling ----
N_NODES = 256    # number of graph nodes
TILE_N = 128     # node (lane) tile; use 256+ on v6e/v7x for large graphs


def dagnn_kernel(xT_ref, adjT_ref,
                 w1_ref, b1_ref, w2_ref, b2_ref, w3_ref, b3_ref,
                 pw_ref, pb_ref,
                 out_ref,
                 prev_ref, next_ref, acc_ref):
    p = pl.program_id(0)                   # phase: 0 = MLP, 1..K = propagation steps
    i = pl.program_id(1)                   # node (lane) tile index
    tn = out_ref.shape[1]
    col = pl.ds(pl.multiple_of(i * tn, tn), tn)

    pw = pw_ref[...]                       # [C, 1]  Prop.proj weight (column)
    pb = pb_ref[0, 0]                      # scalar  Prop.proj bias (SMEM / scalar path)

    def retain(t):
        # retain score sigmoid(proj(t)) per node: 4-row sublane reduce (XLU) + sigmoid (EUP)
        return jax.nn.sigmoid(jnp.sum(t * pw, axis=0, keepdims=True) + pb)

    @pl.when(p == 0)
    def _mlp():
        # x = relu(lin1(x)); x = relu(lins[0](x)); x = relu(lins[1](x))   (dropout = identity)
        h = jnp.maximum(jnp.dot(w1_ref[...], xT_ref[...],
                                preferred_element_type=jnp.float32) + b1_ref[...], 0.0)
        h = jnp.maximum(jnp.dot(w2_ref[...], h,
                                preferred_element_type=jnp.float32) + b2_ref[...], 0.0)
        h = jnp.maximum(jnp.dot(w3_ref[...], h,
                                preferred_element_type=jnp.float32) + b3_ref[...], 0.0)
        next_ref[:, col] = h
        acc_ref[:, col] = retain(h) * h

    @pl.when(p > 0)
    def _prop():
        # (A^p h)^T tile = prev[C, N] @ adjT[N, tn]; bf16 inputs, f32 accumulation.
        cur = jnp.dot(prev_ref[...].astype(jnp.bfloat16), adjT_ref[...],
                      preferred_element_type=jnp.float32)
        next_ref[:, col] = cur
        acc_ref[:, col] = acc_ref[:, col] + retain(cur) * cur

    # lane-dense store of the running DAGNN accumulation for this node tile
    out_ref[...] = acc_ref[:, col].astype(out_ref.dtype)

    # end of a phase (last node tile): promote the freshly computed state to "prev"
    @pl.when(i == pl.num_programs(1) - 1)
    def _advance():
        prev_ref[...] = next_ref[...]


@functools.partial(jax.jit, static_argnames=("tile_n", "k"))
def dagnn_forward(x, edge_index, edge_attr, params, *, tile_n=TILE_N, k=K):
    """x: [N, n_features]; edge_index: [2, E] = (src, dst); edge_attr: [E] edge norms."""
    w1, b1, w2, b2, w3, b3, pw, pb = params
    n, f = x.shape
    hdim = w1.shape[0]
    c = w3.shape[0]

    if n % tile_n != 0:
        tile_n = n                          # single-tile fallback (blocks == full dims)
    num_tiles = n // tile_n
    grid = (k + 1, num_tiles)

    # ---- lane-dense (nodes-on-lanes) layouts, built once in the wrapper ----
    xT = x.T.astype(jnp.float32)                                      # [F, N]
    src, dst = edge_index[0], edge_index[1]
    # adjT[j, i] = norm of edge j -> i   (so x' = A @ x  <=>  x'^T = x^T @ adjT)
    # TODO(synk): for large sparse graphs, keep edge_index in CSR form and drive a
    # gather-based propagation via PrefetchScalarGridSpec instead of densifying to [N, N].
    adjT = (jnp.zeros((n, n), jnp.float32)
            .at[src, dst].add(edge_attr.astype(jnp.float32))
            .astype(jnp.bfloat16))                                    # bf16 halves HBM traffic
    b1c = b1.reshape(-1, 1).astype(jnp.float32)
    b2c = b2.reshape(-1, 1).astype(jnp.float32)
    b3c = b3.reshape(-1, 1).astype(jnp.float32)
    pw_col = pw.reshape(-1, 1).astype(jnp.float32)                    # [C, 1]
    pb_s = pb.reshape(1, 1).astype(jnp.float32)                       # scalar for SMEM

    col_map = lambda p, i: (0, i)
    const_map = lambda p, i: (0, 0)
    # adjT is unused during the MLP phase (p == 0): freeze its block index at 0 there so the
    # pipeline issues exactly K full adjacency reads (no redundant phase-0 DMAs).
    adj_map = lambda p, i: (0, i * jnp.minimum(p, 1))

    grid_spec = pltpu.PrefetchScalarGridSpec(
        num_scalar_prefetch=0,
        grid=grid,
        in_specs=[
            pl.BlockSpec((f, tile_n), col_map),                       # xT
            pl.BlockSpec((n, tile_n), adj_map),                       # adjT (full contraction dim)
            pl.BlockSpec((hdim, f), const_map),                       # w1 (resident)
            pl.BlockSpec((hdim, 1), const_map),                       # b1
            pl.BlockSpec((hdim, hdim), const_map),                    # w2
            pl.BlockSpec((hdim, 1), const_map),                       # b2
            pl.BlockSpec((c, hdim), const_map),                       # w3
            pl.BlockSpec((c, 1), const_map),                          # b3
            pl.BlockSpec((c, 1), const_map),                          # Prop.proj weight
            pl.BlockSpec(memory_space=pltpu.MemorySpace.SMEM),        # Prop.proj bias (scalar)
        ],
        out_specs=pl.BlockSpec((c, tile_n), col_map),
        scratch_shapes=[
            pltpu.VMEM((c, n), jnp.float32),   # prev propagation state (all nodes)
            pltpu.VMEM((c, n), jnp.float32),   # next propagation state (all nodes)
            pltpu.VMEM((c, n), jnp.float32),   # running DAGNN output accumulation
        ],
    )

    outT = pl.pallas_call(
        dagnn_kernel,
        out_shape=jax.ShapeDtypeStruct((c, n), jnp.float32),
        grid_spec=grid_spec,
        compiler_params=pltpu.CompilerParams(
            # Both axes "arbitrary": the propagation scratch carries state across node tiles
            # (each step reads all nodes of the previous step), so no megacore sharding here.
            dimension_semantics=("arbitrary", "arbitrary"),
            vmem_limit_bytes=32 * 1024 * 1024,   # explicit; safe on v5e/v6e/v7x
        ),
    )(xT, adjT, w1.astype(jnp.float32), b1c, w2.astype(jnp.float32), b2c,
      w3.astype(jnp.float32), b3c, pw_col, pb_s)

    return outT.T                                                     # [N, n_classes]


def ref_forward(x, edge_index, edge_attr, params, *, k=K, match_kernel_precision=False):
    """Pure-JAX reference mirroring the PyTorch forward (eval mode)."""
    w1, b1, w2, b2, w3, b3, pw, pb = params
    n = x.shape[0]
    src, dst = edge_index[0], edge_index[1]
    adj = jnp.zeros((n, n), jnp.float32).at[dst, src].add(edge_attr)  # A[i, j] = w(j->i)
    if match_kernel_precision:
        adj = adj.astype(jnp.bfloat16)

    hp = jax.lax.Precision.HIGHEST
    h = jax.nn.relu(jnp.dot(x, w1.T, precision=hp) + b1)
    h = jax.nn.relu(jnp.dot(h, w2.T, precision=hp) + b2)
    h = jax.nn.relu(jnp.dot(h, w3.T, precision=hp) + b3)

    preds = [h]
    cur = h
    for _ in range(k):
        if match_kernel_precision:
            cur = jnp.dot(adj, cur.astype(jnp.bfloat16),
                          preferred_element_type=jnp.float32)
        else:
            cur = jnp.dot(adj, cur, precision=hp)
        preds.append(cur)
    pps = jnp.stack(preds, axis=1)                                    # [N, K+1, C]
    scores = jax.nn.sigmoid(jnp.sum(pps * pw[0][None, None, :], axis=-1) + pb[0])
    return jnp.sum(scores[..., None] * pps, axis=1)                   # [N, C]


def init_params(key):
    """PyTorch-default Linear init; weights kept in PyTorch [out, in] orientation."""
    ks = jax.random.split(key, 8)

    def linear(kw, kb, fan_in, fan_out):
        bound = 1.0 / jnp.sqrt(fan_in)
        w = jax.random.uniform(kw, (fan_out, fan_in), jnp.float32, -bound, bound)
        b = jax.random.uniform(kb, (fan_out,), jnp.float32, -bound, bound)
        return w, b

    w1, b1 = linear(ks[0], ks[1], N_FEAT, N_HID)   # lin1
    w2, b2 = linear(ks[2], ks[3], N_HID, N_HID)    # lins[0]
    w3, b3 = linear(ks[4], ks[5], N_HID, N_CLS)    # lins[1]
    pw, pb = linear(ks[6], ks[7], N_CLS, 1)        # Prop.proj: Linear(n_classes, 1)
    return (w1, b1, w2, b2, w3, b3, pw, pb)


def build_graph(n):
    """Deterministic ring graph + self-loops with GCN-style edge norms."""
    nodes = jnp.arange(n)
    src = jnp.concatenate([nodes, nodes, nodes])
    dst = jnp.concatenate([(nodes + 1) % n, (nodes - 1) % n, nodes])
    deg = jnp.full((n,), 3.0)                                         # ring(2) + self-loop
    norm = 1.0 / jnp.sqrt(deg[src] * deg[dst])                        # edge_attr
    edge_index = jnp.stack([src, dst])                                # [2, E]
    return edge_index, norm


if __name__ == "__main__":
    key = jax.random.PRNGKey(0)
    k_param, k_x = jax.random.split(key)

    params = init_params(k_param)
    x = jax.random.normal(k_x, (N_NODES, N_FEAT), jnp.float32)
    edge_index, edge_attr = build_graph(N_NODES)

    out = dagnn_forward(x, edge_index, edge_attr, params, tile_n=TILE_N, k=K)
    out = jax.block_until_ready(out)
    assert out.shape == (N_NODES, N_CLS)

    ref_matched = ref_forward(x, edge_index, edge_attr, params, k=K,
                              match_kernel_precision=True)
    ref_f32 = ref_forward(x, edge_index, edge_attr, params, k=K,
                          match_kernel_precision=False)
    assert jnp.allclose(out, ref_matched, atol=5e-3, rtol=5e-3), \
        "mismatch vs precision-matched reference"
    assert jnp.allclose(out, ref_f32, atol=5e-2, rtol=5e-2), \
        "mismatch vs float32 reference"

    print("KERNEL_OK")
</pallas_src>

<mosaic_0001>
module attributes {stable_mosaic.version = 11 : i64} {
  func.func private @main(%arg0: i32) attributes {dimension_semantics = [#tpu.dimension_semantics<core_parallel>], iteration_bounds = array<i64: 2>, tpu.core_type = #tpu.core_type<sc_scalar_subcore>, window_params = []} {
    return
  }
}

module attributes {stable_mosaic.version = 11 : i64} {
  func.func private @main(%arg0: i32) attributes {dimension_semantics = [#tpu.dimension_semantics<core_parallel>], iteration_bounds = array<i64: 2>, tpu.core_type = #tpu.core_type<sc_scalar_subcore>, window_params = []} {
    return
  }
}

module attributes {stable_mosaic.version = 11 : i64} {
  func.func @dagnn_kernel(%arg0: i32, %arg1: i32, %arg2: memref<8x128xf32, #tpu.memory_space<vmem>>, %arg3: memref<256x128xbf16, #tpu.memory_space<vmem>>, %arg4: memref<32x8xf32, #tpu.memory_space<vmem>>, %arg5: memref<32x1xf32, #tpu.memory_space<vmem>>, %arg6: memref<32x32xf32, #tpu.memory_space<vmem>>, %arg7: memref<32x1xf32, #tpu.memory_space<vmem>>, %arg8: memref<4x32xf32, #tpu.memory_space<vmem>>, %arg9: memref<4x1xf32, #tpu.memory_space<vmem>>, %arg10: memref<4x1xf32, #tpu.memory_space<vmem>>, %arg11: memref<1x1xf32, #tpu.memory_space<smem>>, %arg12: memref<4x128xf32, #tpu.memory_space<vmem>>, %arg13: memref<4x256xf32, #tpu.memory_space<vmem>>, %arg14: memref<4x256xf32, #tpu.memory_space<vmem>>, %arg15: memref<4x256xf32, #tpu.memory_space<vmem>>) attributes {dimension_semantics = [#tpu.dimension_semantics<arbitrary>, #tpu.dimension_semantics<arbitrary>], iteration_bounds = array<i64: 5, 2>, scalar_prefetch = 0 : i64, scratch_operands = 3 : i64, tpu.core_type = #tpu.core_type<tc>, window_params = [{transform_indices = @transform_0, window_bounds = array<i64: 8, 128>}, {transform_indices = @transform_1, window_bounds = array<i64: 256, 128>}, {pipeline_mode = #tpu.pipeline_mode<synchronous>, transform_indices = @transform_2, window_bounds = array<i64: 32, 8>}, {pipeline_mode = #tpu.pipeline_mode<synchronous>, transform_indices = @transform_3, window_bounds = array<i64: 32, 1>}, {pipeline_mode = #tpu.pipeline_mode<synchronous>, transform_indices = @transform_4, window_bounds = array<i64: 32, 32>}, {pipeline_mode = #tpu.pipeline_mode<synchronous>, transform_indices = @transform_5, window_bounds = array<i64: 32, 1>}, {pipeline_mode = #tpu.pipeline_mode<synchronous>, transform_indices = @transform_6, window_bounds = array<i64: 4, 32>}, {pipeline_mode = #tpu.pipeline_mode<synchronous>, transform_indices = @transform_7, window_bounds = array<i64: 4, 1>}, {pipeline_mode = #tpu.pipeline_mode<synchronous>, transform_indices = @transform_8, window_bounds = array<i64: 4, 1>}, {transform_indices = @transform_9, window_bounds = array<i64: 1, 1>}, {transform_indices = @transform_10, window_bounds = array<i64: 4, 128>}]} {
    %c128_i32 = arith.constant 128 : i32
    %0 = arith.muli %arg1, %c128_i32 : i32
    %1 = tpu.assume_multiple %0, 128 : i32
    %c0 = arith.constant 0 : index
    %c0_0 = arith.constant 0 : index
    %2 = vector.load %arg10[%c0, %c0_0] : memref<4x1xf32, #tpu.memory_space<vmem>>, vector<4x1xf32>
    %c0_1 = arith.constant 0 : index
    %c0_2 = arith.constant 0 : index
    %3 = memref.load %arg11[%c0_1, %c0_2] : memref<1x1xf32, #tpu.memory_space<smem>>
    %c0_i32 = arith.constant 0 : i32
    %4 = arith.cmpi eq, %arg0, %c0_i32 : i32
    %5 = arith.extui %4 : i1 to i32
    %c0_i32_3 = arith.constant 0 : i32
    %6 = arith.cmpi ne, %5, %c0_i32_3 : i32
    scf.if %6 {
      %c0_10 = arith.constant 0 : index
      %c0_11 = arith.constant 0 : index
      %16 = vector.load %arg4[%c0_10, %c0_11] : memref<32x8xf32, #tpu.memory_space<vmem>>, vector<32x8xf32>
      %c0_12 = arith.constant 0 : index
      %c0_13 = arith.constant 0 : index
      %17 = vector.load %arg2[%c0_12, %c0_13] : memref<8x128xf32, #tpu.memory_space<vmem>>, vector<8x128xf32>
      %cst = arith.constant dense<0.000000e+00> : vector<32x128xf32>
      %18 = tpu.matmul %16, %17, %cst {dimension_numbers = #tpu.dot_dimension_numbers<[1], [0], [0], [1], [0, 0, 1, 1], [], []>} : vector<32x8xf32>, vector<8x128xf32>, vector<32x128xf32> -> vector<32x128xf32>
      %c0_14 = arith.constant 0 : index
      %c0_15 = arith.constant 0 : index
      %19 = vector.load %arg5[%c0_14, %c0_15] : memref<32x1xf32, #tpu.memory_space<vmem>>, vector<32x1xf32>
      %20 = vector.broadcast %19 : vector<32x1xf32> to vector<32x128xf32>
      %21 = arith.addf %18, %20 : vector<32x128xf32>
      %cst_16 = arith.constant 0.000000e+00 : f32
      %22 = vector.broadcast %cst_16 : f32 to vector<32x128xf32>
      %23 = arith.maximumf %21, %22 : vector<32x128xf32>
      %c0_17 = arith.constant 0 : index
      %c0_18 = arith.constant 0 : index
      %24 = vector.load %arg6[%c0_17, %c0_18] : memref<32x32xf32, #tpu.memory_space<vmem>>, vector<32x32xf32>
      %cst_19 = arith.constant dense<0.000000e+00> : vector<32x128xf32>
      %25 = tpu.matmul %24, %23, %cst_19 {dimension_numbers = #tpu.dot_dimension_numbers<[1], [0], [0], [1], [0, 0, 1, 1], [], []>} : vector<32x32xf32>, vector<32x128xf32>, vector<32x128xf32> -> vector<32x128xf32>
      %c0_20 = arith.constant 0 : index
      %c0_21 = arith.constant 0 : index
      %26 = vector.load %arg7[%c0_20, %c0_21] : memref<32x1xf32, #tpu.memory_space<vmem>>, vector<32x1xf32>
      %27 = vector.broadcast %26 : vector<32x1xf32> to vector<32x128xf32>
      %28 = arith.addf %25, %27 : vector<32x128xf32>
      %cst_22 = arith.constant 0.000000e+00 : f32
      %29 = vector.broadcast %cst_22 : f32 to vector<32x128xf32>
      %30 = arith.maximumf %28, %29 : vector<32x128xf32>
      %c0_23 = arith.constant 0 : index
      %c0_24 = arith.constant 0 : index
      %31 = vector.load %arg8[%c0_23, %c0_24] : memref<4x32xf32, #tpu.memory_space<vmem>>, vector<4x32xf32>
      %cst_25 = arith.constant dense<0.000000e+00> : vector<4x128xf32>
      %32 = tpu.matmul %31, %30, %cst_25 {dimension_numbers = #tpu.dot_dimension_numbers<[1], [0], [0], [1], [0, 0, 1, 1], [], []>} : vector<4x32xf32>, vector<32x128xf32>, vector<4x128xf32> -> vector<4x128xf32>
      %c0_26 = arith.constant 0 : index
      %c0_27 = arith.constant 0 : index
      %33 = vector.load %arg9[%c0_26, %c0_27] : memref<4x1xf32, #tpu.memory_space<vmem>>, vector<4x1xf32>
      %34 = vector.broadcast %33 : vector<4x1xf32> to vector<4x128xf32>
      %35 = arith.addf %32, %34 : vector<4x128xf32>
      %cst_28 = arith.constant 0.000000e+00 : f32
      %36 = vector.broadcast %cst_28 : f32 to vector<4x128xf32>
      %37 = arith.maximumf %35, %36 : vector<4x128xf32>
      %c0_29 = arith.constant 0 : index
      %38 = arith.index_cast %1 : i32 to index
      %39 = vector.load %arg14[%c0_29, %38] : memref<4x256xf32, #tpu.memory_space<vmem>>, vector<4x128xf32>
      tpu.vector_store %arg14[%c0_29, %38], %37 {strides = array<i32>} : memref<4x256xf32, #tpu.memory_space<vmem>>, vector<4x128xf32>,
      %40 = vector.broadcast %2 : vector<4x1xf32> to vector<4x128xf32>
      %41 = arith.mulf %37, %40 : vector<4x128xf32>
      %cst_30 = arith.constant dense<0.000000e+00> : vector<128xf32>
      %42 = vector.multi_reduction <add>, %41, %cst_30 [0] : vector<4x128xf32> to vector<128xf32>
      %43 = vector.shape_cast %42 : vector<128xf32> to vector<1x128xf32>
      %44 = vector.broadcast %3 : f32 to vector<1x128xf32>
      %45 = arith.addf %43, %44 : vector<1x128xf32>
      %46 = arith.negf %45 : vector<1x128xf32>
      %47 = math.exp %46 : vector<1x128xf32>
      %cst_31 = arith.constant 1.000000e+00 : f32
      %48 = vector.broadcast %cst_31 : f32 to vector<1x128xf32>
      %49 = arith.addf %48, %47 : vector<1x128xf32>
      %50 = arith.divf %48, %49 : vector<1x128xf32>
      %51 = vector.broadcast %50 : vector<1x128xf32> to vector<4x128xf32>
      %52 = arith.mulf %51, %37 : vector<4x128xf32>
      %c0_32 = arith.constant 0 : index
      %53 = arith.index_cast %1 : i32 to index
      %54 = vector.load %arg15[%c0_32, %53] : memref<4x256xf32, #tpu.memory_space<vmem>>, vector<4x128xf32>
      tpu.vector_store %arg15[%c0_32, %53], %52 {strides = array<i32>} : memref<4x256xf32, #tpu.memory_space<vmem>>, vector<4x128xf32>,
    } else {
    }
    %c0_i32_4 = arith.constant 0 : i32
    %7 = arith.cmpi sgt, %arg0, %c0_i32_4 : i32
    %8 = arith.extui %7 : i1 to i32
    %c0_i32_5 = arith.constant 0 : i32
    %9 = arith.cmpi ne, %8, %c0_i32_5 : i32
    scf.if %9 {
      %c0_10 = arith.constant 0 : index
      %c0_11 = arith.constant 0 : index
      %16 = vector.load %arg13[%c0_10, %c0_11] : memref<4x256xf32, #tpu.memory_space<vmem>>, vector<4x256xf32>
      %17 = arith.truncf %16 : vector<4x256xf32> to vector<4x256xbf16>
      %c0_12 = arith.constant 0 : index
      %c0_13 = arith.constant 0 : index
      %18 = vector.load %arg3[%c0_12, %c0_13] : memref<256x128xbf16, #tpu.memory_space<vmem>>, vector<256x128xbf16>
      %cst = arith.constant dense<0.000000e+00> : vector<4x128xf32>
      %19 = tpu.matmul %17, %18, %cst {dimension_numbers = #tpu.dot_dimension_numbers<[1], [0], [0], [1], [0, 0, 1, 1], [], []>} : vector<4x256xbf16>, vector<256x128xbf16>, vector<4x128xf32> -> vector<4x128xf32>
      %c0_14 = arith.constant 0 : index
      %20 = arith.index_cast %1 : i32 to index
      %21 = vector.load %arg14[%c0_14, %20] : memref<4x256xf32, #tpu.memory_space<vmem>>, vector<4x128xf32>
      tpu.vector_store %arg14[%c0_14, %20], %19 {strides = array<i32>} : memref<4x256xf32, #tpu.memory_space<vmem>>, vector<4x128xf32>,
      %c0_15 = arith.constant 0 : index
      %22 = arith.index_cast %1 : i32 to index
      %23 = vector.load %arg15[%c0_15, %22] : memref<4x256xf32, #tpu.memory_space<vmem>>, vector<4x128xf32>
      %24 = vector.broadcast %2 : vector<4x1xf32> to vector<4x128xf32>
      %25 = arith.mulf %19, %24 : vector<4x128xf32>
      %cst_16 = arith.constant dense<0.000000e+00> : vector<128xf32>
      %26 = vector.multi_reduction <add>, %25, %cst_16 [0] : vector<4x128xf32> to vector<128xf32>
      %27 = vector.shape_cast %26 : vector<128xf32> to vector<1x128xf32>
      %28 = vector.broadcast %3 : f32 to vector<1x128xf32>
      %29 = arith.addf %27, %28 : vector<1x128xf32>
      %30 = arith.negf %29 : vector<1x128xf32>
      %31 = math.exp %30 : vector<1x128xf32>
      %cst_17 = arith.constant 1.000000e+00 : f32
      %32 = vector.broadcast %cst_17 : f32 to vector<1x128xf32>
      %33 = arith.addf %32, %31 : vector<1x128xf32>
      %34 = arith.divf %32, %33 : vector<1x128xf32>
      %35 = vector.broadcast %34 : vector<1x128xf32> to vector<4x128xf32>
      %36 = arith.mulf %35, %19 : vector<4x128xf32>
      %37 = arith.addf %23, %36 : vector<4x128xf32>
      %c0_18 = arith.constant 0 : index
      %38 = arith.index_cast %1 : i32 to index
      %39 = vector.load %arg15[%c0_18, %38] : memref<4x256xf32, #tpu.memory_space<vmem>>, vector<4x128xf32>
      tpu.vector_store %arg15[%c0_18, %38], %37 {strides = array<i32>} : memref<4x256xf32, #tpu.memory_space<vmem>>, vector<4x128xf32>,
    } else {
    }
    %c0_6 = arith.constant 0 : index
    %10 = arith.index_cast %1 : i32 to index
    %11 = vector.load %arg15[%c0_6, %10] : memref<4x256xf32, #tpu.memory_space<vmem>>, vector<4x128xf32>
    %c0_7 = arith.constant 0 : index
    %c0_8 = arith.constant 0 : index
    %12 = vector.load %arg12[%c0_7, %c0_8] : memref<4x128xf32, #tpu.memory_space<vmem>>, vector<4x128xf32>
    tpu.vector_store %arg12[%c0_7, %c0_8], %11 {strides = array<i32>} : memref<4x128xf32, #tpu.memory_space<vmem>>, vector<4x128xf32>,
    %c1_i32 = arith.constant 1 : i32
    %13 = arith.cmpi eq, %arg1, %c1_i32 : i32
    %14 = arith.extui %13 : i1 to i32
    %c0_i32_9 = arith.constant 0 : i32
    %15 = arith.cmpi ne, %14, %c0_i32_9 : i32
    scf.if %15 {
      %c0_10 = arith.constant 0 : index
      %c0_11 = arith.constant 0 : index
      %16 = vector.load %arg14[%c0_10, %c0_11] : memref<4x256xf32, #tpu.memory_space<vmem>>, vector<4x256xf32>
      %c0_12 = arith.constant 0 : index
      %c0_13 = arith.constant 0 : index
      %17 = vector.load %arg13[%c0_12, %c0_13] : memref<4x256xf32, #tpu.memory_space<vmem>>, vector<4x256xf32>
      tpu.vector_store %arg13[%c0_12, %c0_13], %16 {strides = array<i32>} : memref<4x256xf32, #tpu.memory_space<vmem>>, vector<4x256xf32>,
    } else {
    }
    return
  }
  func.func @transform_0(%arg0: i32, %arg1: i32) -> (i32, i32) {
    %c0_i32 = arith.constant 0 : i32
    %c0_i32_0 = arith.constant 0 : i32
    return %c0_i32, %arg1 : i32, i32
  }
  func.func @transform_1(%arg0: i32, %arg1: i32) -> (i32, i32) {
    %c1_i32 = arith.constant 1 : i32
    %0 = arith.minsi %arg0, %c1_i32 : i32
    %1 = arith.muli %arg1, %0 : i32
    %c0_i32 = arith.constant 0 : i32
    %c0_i32_0 = arith.constant 0 : i32
    return %c0_i32, %1 : i32, i32
  }
  func.func @transform_2(%arg0: i32, %arg1: i32) -> (i32, i32) {
    %c0_i32 = arith.constant 0 : i32
    %c0_i32_0 = arith.constant 0 : i32
    %c0_i32_1 = arith.constant 0 : i32
    return %c0_i32, %c0_i32_0 : i32, i32
  }
  func.func @transform_3(%arg0: i32, %arg1: i32) -> (i32, i32) {
    %c0_i32 = arith.constant 0 : i32
    %c0_i32_0 = arith.constant 0 : i32
    %c0_i32_1 = arith.constant 0 : i32
    return %c0_i32, %c0_i32_0 : i32, i32
  }
  func.func @transform_4(%arg0: i32, %arg1: i32) -> (i32, i32) {
    %c0_i32 = arith.constant 0 : i32
    %c0_i32_0 = arith.constant 0 : i32
    %c0_i32_1 = arith.constant 0 : i32
    return %c0_i32, %c0_i32_0 : i32, i32
  }
  func.func @transform_5(%arg0: i32, %arg1: i32) -> (i32, i32) {
    %c0_i32 = arith.constant 0 : i32
    %c0_i32_0 = arith.constant 0 : i32
    %c0_i32_1 = arith.constant 0 : i32
    return %c0_i32, %c0_i32_0 : i32, i32
  }
  func.func @transform_6(%arg0: i32, %arg1: i32) -> (i32, i32) {
    %c0_i32 = arith.constant 0 : i32
    %c0_i32_0 = arith.constant 0 : i32
    %c0_i32_1 = arith.constant 0 : i32
    return %c0_i32, %c0_i32_0 : i32, i32
  }
  func.func @transform_7(%arg0: i32, %arg1: i32) -> (i32, i32) {
    %c0_i32 = arith.constant 0 : i32
    %c0_i32_0 = arith.constant 0 : i32
    %c0_i32_1 = arith.constant 0 : i32
    return %c0_i32, %c0_i32_0 : i32, i32
  }
  func.func @transform_8(%arg0: i32, %arg1: i32) -> (i32, i32) {
    %c0_i32 = arith.constant 0 : i32
    %c0_i32_0 = arith.constant 0 : i32
    %c0_i32_1 = arith.constant 0 : i32
    return %c0_i32, %c0_i32_0 : i32, i32
  }
  func.func @transform_9(%arg0: i32, %arg1: i32) -> (i32, i32) {
    %c0_i32 = arith.constant 0 : i32
    %c0_i32_0 = arith.constant 0 : i32
    %c0_i32_1 = arith.constant 0 : i32
    return %c0_i32, %c0_i32_0 : i32, i32
  }
  func.func @transform_10(%arg0: i32, %arg1: i32) -> (i32, i32) {
    %c0_i32 = arith.constant 0 : i32
    %c0_i32_0 = arith.constant 0 : i32
    return %c0_i32, %arg1 : i32, i32
  }
}

</mosaic_0001>

<llo_original>
// kernel: dagnn_forward.1
$region0: #{dagnn_forward.1}
  #allocation0 [shape = 'u32[]', space=smem, size = 0x4, offset = 0x4, fixed_abs, tag = 'smem constant byte address 0x4 - core index']
  #allocation1 [shape = 'u32[144,128]{1,0:T(1,128)}', space=vmem, size = 0x12000, scoped, tag = 'internal scratch']
  #allocation2 [shape = 'f32[4,256]{1,0:T(4,128)}', space=vmem, size = 0x1000, scoped, tag = 'scratch operand']
  #allocation3 [shape = 'f32[4,256]{1,0:T(4,128)}', space=vmem, size = 0x1000, scoped, tag = 'scratch operand']
  #allocation4 [shape = 'f32[4,256]{1,0:T(4,128)}', space=vmem, size = 0x1000, scoped, tag = 'scratch operand']
  #allocation5 [shape = 'f32[1,1]{1,0:T(1,128)S(6)}', space=smem, size = 0x200, scoped, tag = 'scoped memory for dagnn_forward.1']
  %s0 = inlined_call_operand.vmem [shape: f32[8,256], index: 0, kind: input, shape index: {}]
  %s1 = inlined_call_operand.vmem [shape: bf16[256,256], index: 1, kind: input, shape index: {}]
  %s2 = inlined_call_operand.vmem [shape: f32[32,8], index: 2, kind: input, shape index: {}]
  %s3 = inlined_call_operand.vmem [shape: f32[32,1], index: 3, kind: input, shape index: {}]
  %s4 = inlined_call_operand.vmem [shape: f32[32,32], index: 4, kind: input, shape index: {}]
  %s5 = inlined_call_operand.vmem [shape: f32[32,1], index: 5, kind: input, shape index: {}]
  %s6 = inlined_call_operand.vmem [shape: f32[4,32], index: 6, kind: input, shape index: {}]
  %s7 = inlined_call_operand.vmem [shape: f32[4,1], index: 7, kind: input, shape index: {}]
  %s8 = inlined_call_operand.vmem [shape: f32[4,1], index: 8, kind: input, shape index: {}]
  %s9 = inlined_call_operand.<no memory space> [shape: f32[1,1], index: 9, kind: input, shape index: {}]
  %s10 = inlined_call_operand.hbm [shape: f32[4,256], index: 10, kind: output, shape index: {}]
  %s11 = sld [smem:[#allocation0]]
  $region126: #{dagnn_forward.1} parent=0
    _
  %s13 = ssub.s32 1, %s11
  %s14 = scalar_select 0, %s13, %s11
  %15 = sst [smem:[#allocation5]] %s9
  $region1: #{dagnn_forward.1} parent=0
    #allocation6 [shape = 'u8[131072]{0}', space=vmem, size = 0x20000, scoped, tag = 'input window, operand 1']
    #allocation7 [shape = 'u8[4096]{0}', space=vmem, size = 0x1000, scoped, tag = 'output window, operand 0']
    #allocation8 [shape = 's32[2]{0}', space=sflag, size = 0x8, scoped, tag = 'scoped memory for dagnn_forward.1']
    %16 = vsyncpa [#allocation8], 0
    %s17 = scalar_lea.sflag [#allocation8], 1
    %18 = vsyncpa %s17, 0
    loop: start=0, step=1, limit=12
    $region2: #{dagnn_forward.1} parent=1 // loop_pre_header
      _
    $region3: #{dagnn_forward.1} parent=1 // loop_header
      %s20 = sphi 0, %s24
      %p21 = scmp.ge.s32.totalorder %s20, 12
      %s27 = sphi 0, %s39
      %s28 = sphi 0, %s35
      %s29 = sphi 0, %s27
      %s30 = sphi 0, %s28
      %s31 = sphi 0, %s29
      %s32 = sphi 0, %s30
      %s42 = sphi 0, %s44
      %s45 = sphi 0, %s42
      %s46 = sphi 0, %s45
      %s62 = sphi 0, %s46
      %s74 = sphi 0, %s76
      %s77 = sphi 0, %s74
      %s78 = sphi 0, %s77
      %s94 = sphi 0, %s78
      %s98 = sphi 0, %s98
      %s100 = sphi 0, %s98
      %s101 = sphi 0, %s100
      %s115 = sphi 0, %s101
      %s119 = sphi 0, %s119
      %s121 = sphi 0, %s119
      %s122 = sphi 0, %s121
      %s136 = sphi 0, %s122
      %s140 = sphi 0, %s140
      %s142 = sphi 0, %s140
      %s143 = sphi 0, %s142
      %s157 = sphi 0, %s143
      %s161 = sphi 0, %s161
      %s163 = sphi 0, %s161
      %s164 = sphi 0, %s163
      %s178 = sphi 0, %s164
      %s182 = sphi 0, %s182
      %s184 = sphi 0, %s182
      %s185 = sphi 0, %s184
      %s199 = sphi 0, %s185
      %s203 = sphi 0, %s203
      %s205 = sphi 0, %s203
      %s206 = sphi 0, %s205
      %s220 = sphi 0, %s206
      %s224 = sphi 0, %s224
      %s226 = sphi 0, %s224
      %s227 = sphi 0, %s226
      %s241 = sphi 0, %s227
      %s245 = sphi 0, %s245
      %s247 = sphi 0, %s245
      %s248 = sphi 0, %s247
      %s262 = sphi 0, %s248
      %s268 = sphi 0, %s270
      %s271 = sphi 0, %s268
      %s272 = sphi 0, %s271
      %s288 = sphi 0, %s272
    $region4: #{dagnn_forward.1} parent=1 // loop_header_branch
      %23 = sbr.rel (%p21) target = $region8
    $region5: #{dagnn_forward.1} parent=1 // loop_body
      %s25 = ssub.s32 %s20, 1
      %s26 = ssub.s32 %s20, 2
      %s33 = sadd.s32 1, %s28
      %p34 = scmp.ge.s32.totalorder %s33, 2
      %s35 = scalar_select %p34, 0, %s33
      %s36 = sadd.s32 1, %s27
      %s37 = scalar_select %p34, %s36, %s27
      %p38 = scmp.ge.s32.totalorder %s37, 5
      %s39 = scalar_select %p38, 0, %s37
      %s40 = ssub.s32 %s28, %s35
      %p41 = scmp.eq.s32.totalorder %s40, 0
      %s43 = sadd.s32 %s42, 1
      %s44 = scalar_select %p41, %s42, %s43
      %p47 = pneg %p41
      %p48 = scmp.eq.s32.totalorder %s20, 9
      %p49 = por %p47, %p48
      %p50 = scmp.ne.s32.totalorder %s42, %s45
      %p51 = scmp.eq.s32.totalorder %s20, 0
      %p52 = por %p50, %p51
      %p53 = scmp.ne.s32.totalorder %s42, %s45
      %p54 = scmp.eq.s32.totalorder %s25, 9
      %p55 = por %p53, %p54
      %p56 = scmp.ne.s32.totalorder %s45, %s46
      %p57 = scmp.eq.s32.totalorder %s25, 0
      %p58 = por %p56, %p57
      %p59 = scmp.ne.s32.totalorder %s45, %s46
      %p60 = scmp.eq.s32.totalorder %s26, 9
      %p61 = por %p59, %p60
      %p63 = scmp.ne.s32.totalorder %s46, %s62
      %p64 = scmp.eq.s32.totalorder %s26, 0
      %p65 = por %p63, %p64
      %p66 = scmp.lt.s32.totalorder %s27, 1
      %s67 = scalar_select %p66, %s27, 1
      %s68 = smul.u32 %s28, %s67
      %p69 = scmp.lt.s32.totalorder %s39, 1
      %s70 = scalar_select %p69, %s39, 1
      %s71 = smul.u32 %s35, %s70
      %s72 = ssub.s32 %s68, %s71
      %p73 = scmp.eq.s32.totalorder %s72, 0
      %s75 = sadd.s32 %s74, 1
      %s76 = scalar_select %p73, %s74, %s75
      %p79 = pneg %p73
      %p80 = scmp.eq.s32.totalorder %s20, 9
      %p81 = por %p79, %p80
      %p82 = scmp.ne.s32.totalorder %s74, %s77
      %p83 = scmp.eq.s32.totalorder %s20, 0
      %p84 = por %p82, %p83
      %p85 = scmp.ne.s32.totalorder %s74, %s77
      %p86 = scmp.eq.s32.totalorder %s25, 9
      %p87 = por %p85, %p86
      %p88 = scmp.ne.s32.totalorder %s77, %s78
      %p89 = scmp.eq.s32.totalorder %s25, 0
      %p90 = por %p88, %p89
      %p91 = scmp.ne.s32.totalorder %s77, %s78
      %p92 = scmp.eq.s32.totalorder %s26, 9
      %p93 = por %p91, %p92
      %p95 = scmp.ne.s32.totalorder %s78, %s94
      %p96 = scmp.eq.s32.totalorder %s26, 0
      %p97 = por %p95, %p96
      %s99 = sadd.s32 %s98, 1
      %p102 = scmp.eq.s32.totalorder %s20, 9
      %p103 = scmp.ne.s32.totalorder %s98, %s100
      %p104 = scmp.eq.s32.totalorder %s20, 0
      %p105 = por %p103, %p104
      %p106 = scmp.ne.s32.totalorder %s98, %s100
      %p107 = scmp.eq.s32.totalorder %s25, 9
      %p108 = por %p106, %p107
      %p109 = scmp.ne.s32.totalorder %s100, %s101
      %p110 = scmp.eq.s32.totalorder %s25, 0
      %p111 = por %p109, %p110
      %p112 = scmp.ne.s32.totalorder %s100, %s101
      %p113 = scmp.eq.s32.totalorder %s26, 9
      %p114 = por %p112, %p113
      %p116 = scmp.ne.s32.totalorder %s101, %s115
      %p117 = scmp.eq.s32.totalorder %s26, 0
      %p118 = por %p116, %p117
      %s120 = sadd.s32 %s119, 1
      %p123 = scmp.eq.s32.totalorder %s20, 9
      %p124 = scmp.ne.s32.totalorder %s119, %s121
      %p125 = scmp.eq.s32.totalorder %s20, 0
      %p126 = por %p124, %p125
      %p127 = scmp.ne.s32.totalorder %s119, %s121
      %p128 = scmp.eq.s32.totalorder %s25, 9
      %p129 = por %p127, %p128
      %p130 = scmp.ne.s32.totalorder %s121, %s122
      %p131 = scmp.eq.s32.totalorder %s25, 0
      %p132 = por %p130, %p131
      %p133 = scmp.ne.s32.totalorder %s121, %s122
      %p134 = scmp.eq.s32.totalorder %s26, 9
      %p135 = por %p133, %p134
      %p137 = scmp.ne.s32.totalorder %s122, %s136
      %p138 = scmp.eq.s32.totalorder %s26, 0
      %p139 = por %p137, %p138
      %s141 = sadd.s32 %s140, 1
      %p144 = scmp.eq.s32.totalorder %s20, 9
      %p145 = scmp.ne.s32.totalorder %s140, %s142
      %p146 = scmp.eq.s32.totalorder %s20, 0
      %p147 = por %p145, %p146
      %p148 = scmp.ne.s32.totalorder %s140, %s142
      %p149 = scmp.eq.s32.totalorder %s25, 9
      %p150 = por %p148, %p149
      %p151 = scmp.ne.s32.totalorder %s142, %s143
      %p152 = scmp.eq.s32.totalorder %s25, 0
      %p153 = por %p151, %p152
      %p154 = scmp.ne.s32.totalorder %s142, %s143
      %p155 = scmp.eq.s32.totalorder %s26, 9
      %p156 = por %p154, %p155
      %p158 = scmp.ne.s32.totalorder %s143, %s157
      %p159 = scmp.eq.s32.totalorder %s26, 0
      %p160 = por %p158, %p159
      %s162 = sadd.s32 %s161, 1
      %p165 = scmp.eq.s32.totalorder %s20, 9
      %p166 = scmp.ne.s32.totalorder %s161, %s163
      %p167 = scmp.eq.s32.totalorder %s20, 0
      %p168 = por %p166, %p167
      %p169 = scmp.ne.s32.totalorder %s161, %s163
      %p170 = scmp.eq.s32.totalorder %s25, 9
      %p171 = por %p169, %p170
      %p172 = scmp.ne.s32.totalorder %s163, %s164
      %p173 = scmp.eq.s32.totalorder %s25, 0
      %p174 = por %p172, %p173
      %p175 = scmp.ne.s32.totalorder %s163, %s164
      %p176 = scmp.eq.s32.totalorder %s26, 9
      %p177 = por %p175, %p176
      %p179 = scmp.ne.s32.totalorder %s164, %s178
      %p180 = scmp.eq.s32.totalorder %s26, 0
      %p181 = por %p179, %p180
      %s183 = sadd.s32 %s182, 1
      %p186 = scmp.eq.s32.totalorder %s20, 9
      %p187 = scmp.ne.s32.totalorder %s182, %s184
      %p188 = scmp.eq.s32.totalorder %s20, 0
      %p189 = por %p187, %p188
      %p190 = scmp.ne.s32.totalorder %s182, %s184
      %p191 = scmp.eq.s32.totalorder %s25, 9
      %p192 = por %p190, %p191
      %p193 = scmp.ne.s32.totalorder %s184, %s185
      %p194 = scmp.eq.s32.totalorder %s25, 0
      %p195 = por %p193, %p194
      %p196 = scmp.ne.s32.totalorder %s184, %s185
      %p197 = scmp.eq.s32.totalorder %s26, 9
      %p198 = por %p196, %p197
      %p200 = scmp.ne.s32.totalorder %s185, %s199
      %p201 = scmp.eq.s32.totalorder %s26, 0
      %p202 = por %p200, %p201
      %s204 = sadd.s32 %s203, 1
      %p207 = scmp.eq.s32.totalorder %s20, 9
      %p208 = scmp.ne.s32.totalorder %s203, %s205
      %p209 = scmp.eq.s32.totalorder %s20, 0
      %p210 = por %p208, %p209
      %p211 = scmp.ne.s32.totalorder %s203, %s205
      %p212 = scmp.eq.s32.totalorder %s25, 9
      %p213 = por %p211, %p212
      %p214 = scmp.ne.s32.totalorder %s205, %s206
      %p215 = scmp.eq.s32.totalorder %s25, 0
      %p216 = por %p214, %p215
      %p217 = scmp.ne.s32.totalorder %s205, %s206
      %p218 = scmp.eq.s32.totalorder %s26, 9
      %p219 = por %p217, %p218
      %p221 = scmp.ne.s32.totalorder %s206, %s220
      %p222 = scmp.eq.s32.totalorder %s26, 0
      %p223 = por %p221, %p222
      %s225 = sadd.s32 %s224, 1
      %p228 = scmp.eq.s32.totalorder %s20, 9
      %p229 = scmp.ne.s32.totalorder %s224, %s226
      %p230 = scmp.eq.s32.totalorder %s20, 0
      %p231 = por %p229, %p230
      %p232 = scmp.ne.s32.totalorder %s224, %s226
      %p233 = scmp.eq.s32.totalorder %s25, 9
      %p234 = por %p232, %p233
      %p235 = scmp.ne.s32.totalorder %s226, %s227
      %p236 = scmp.eq.s32.totalorder %s25, 0
      %p237 = por %p235, %p236
      %p238 = scmp.ne.s32.totalorder %s226, %s227
      %p239 = scmp.eq.s32.totalorder %s26, 9
      %p240 = por %p238, %p239
      %p242 = scmp.ne.s32.totalorder %s227, %s241
      %p243 = scmp.eq.s32.totalorder %s26, 0
      %p244 = por %p242, %p243
      %s246 = sadd.s32 %s245, 1
      %p249 = scmp.eq.s32.totalorder %s20, 9
      %p250 = scmp.ne.s32.totalorder %s245, %s247
      %p251 = scmp.eq.s32.totalorder %s20, 0
      %p252 = por %p250, %p251
      %p253 = scmp.ne.s32.totalorder %s245, %s247
      %p254 = scmp.eq.s32.totalorder %s25, 9
      %p255 = por %p253, %p254
      %p256 = scmp.ne.s32.totalorder %s247, %s248
      %p257 = scmp.eq.s32.totalorder %s25, 0
      %p258 = por %p256, %p257
      %p259 = scmp.ne.s32.totalorder %s247, %s248
      %p260 = scmp.eq.s32.totalorder %s26, 9
      %p261 = por %p259, %p260
      %p263 = scmp.ne.s32.totalorder %s248, %s262
      %p264 = scmp.eq.s32.totalorder %s26, 0
      %p265 = por %p263, %p264
      %s266 = ssub.s32 %s28, %s35
      %p267 = scmp.eq.s32.totalorder %s266, 0
      %s269 = sadd.s32 %s268, 1
      %s270 = scalar_select %p267, %s268, %s269
      %p273 = pneg %p267
      %p274 = scmp.eq.s32.totalorder %s20, 9
      %p275 = por %p273, %p274
      %p276 = scmp.ne.s32.totalorder %s268, %s271
      %p277 = scmp.eq.s32.totalorder %s20, 0
      %p278 = por %p276, %p277
      %p279 = scmp.ne.s32.totalorder %s268, %s271
      %p280 = scmp.eq.s32.totalorder %s25, 9
      %p281 = por %p279, %p280
      %p282 = scmp.ne.s32.totalorder %s271, %s272
      %p283 = scmp.eq.s32.totalorder %s25, 0
      %p284 = por %p282, %p283
      %p285 = scmp.ne.s32.totalorder %s271, %s272
      %p286 = scmp.eq.s32.totalorder %s26, 9
      %p287 = por %p285, %p286
      %p289 = scmp.ne.s32.totalorder %s272, %s288
      %p290 = scmp.eq.s32.totalorder %s26, 0
      %p291 = por %p289, %p290
      %p292 = scmp.le.s32.totalorder 1, %s20
      %p293 = scmp.lt.s32.totalorder %s20, 11
      %p294 = pnand %p292, %p293
      %p295 = pneg %p294
      // Predicated region
      $region9: #{dagnn_forward.1} parent=5 // pred_check
        _
      $region10: #{dagnn_forward.1} parent=5 // pred_check_branch
        %297 = sbr.rel (%p294) target = $region12
      $region11: #{dagnn_forward.1} parent=5 // pred_region
        %s298 = ssub.s32 %s20, 1
        // Predicated region
        $region13: #{dagnn_forward.1} parent=11 // pred_check
          %p299 = pneg %p111
        $region14: #{dagnn_forward.1} parent=11 // pred_check_branch
          %301 = sbr.rel (%p299) target = $region16
        $region15: #{dagnn_forward.1} parent=11 // pred_region
          _
        $region16: #{dagnn_forward.1} parent=11 // pred_fallthru
          _
        // Predicated region
        $region17: #{dagnn_forward.1} parent=11 // pred_check
          %p302 = pneg %p132
        $region18: #{dagnn_forward.1} parent=11 // pred_check_branch
          %304 = sbr.rel (%p302) target = $region20
        $region19: #{dagnn_forward.1} parent=11 // pred_region
          _
        $region20: #{dagnn_forward.1} parent=11 // pred_fallthru
          _
        // Predicated region
        $region21: #{dagnn_forward.1} parent=11 // pred_check
          %p305 = pneg %p153
        $region22: #{dagnn_forward.1} parent=11 // pred_check_branch
          %307 = sbr.rel (%p305) target = $region24
        $region23: #{dagnn_forward.1} parent=11 // pred_region
          _
        $region24: #{dagnn_forward.1} parent=11 // pred_fallthru
          _
        // Predicated region
        $region25: #{dagnn_forward.1} parent=11 // pred_check
          %p308 = pneg %p174
        $region26: #{dagnn_forward.1} parent=11 // pred_check_branch
          %310 = sbr.rel (%p308) target = $region28
        $region27: #{dagnn_forward.1} parent=11 // pred_region
          _
        $region28: #{dagnn_forward.1} parent=11 // pred_fallthru
          _
        // Predicated region
        $region29: #{dagnn_forward.1} parent=11 // pred_check
          %p311 = pneg %p195
        $region30: #{dagnn_forward.1} parent=11 // pred_check_branch
          %313 = sbr.rel (%p311) target = $region32
        $region31: #{dagnn_forward.1} parent=11 // pred_region
          _
        $region32: #{dagnn_forward.1} parent=11 // pred_fallthru
          _
        // Predicated region
        $region33: #{dagnn_forward.1} parent=11 // pred_check
          %p314 = pneg %p216
        $region34: #{dagnn_forward.1} parent=11 // pred_check_branch
          %316 = sbr.rel (%p314) target = $region36
        $region35: #{dagnn_forward.1} parent=11 // pred_region
          _
        $region36: #{dagnn_forward.1} parent=11 // pred_fallthru
          _
        // Predicated region
        $region37: #{dagnn_forward.1} parent=11 // pred_check
          %p317 = pneg %p237
        $region38: #{dagnn_forward.1} parent=11 // pred_check_branch
          %319 = sbr.rel (%p317) target = $region40
        $region39: #{dagnn_forward.1} parent=11 // pred_region
          _
        $region40: #{dagnn_forward.1} parent=11 // pred_fallthru
          _
        // Predicated region
        $region41: #{dagnn_forward.1} parent=11 // pred_check
          %p320 = pneg %p258
        $region42: #{dagnn_forward.1} parent=11 // pred_check_branch
          %322 = sbr.rel (%p320) target = $region44
        $region43: #{dagnn_forward.1} parent=11 // pred_region
          _
        $region44: #{dagnn_forward.1} parent=11 // pred_fallthru
          _
      $region12: #{dagnn_forward.1} parent=5 // pred_fallthru
        _
      %p323 = scmp.lt.s32.totalorder %s20, 10
      // Predicated region
      $region45: #{dagnn_forward.1} parent=5 // pred_check
        %p324 = pneg %p323
      $region46: #{dagnn_forward.1} parent=5 // pred_check_branch
        %326 = sbr.rel (%p324) target = $region48
      $region47: #{dagnn_forward.1} parent=5 // pred_region
        // Predicated region
        $region49: #{dagnn_forward.1} parent=47 // pred_check
          %p327 = pneg %p52
        $region50: #{dagnn_forward.1} parent=47 // pred_check_branch
          %329 = sbr.rel (%p327) target = $region52
        $region51: #{dagnn_forward.1} parent=47 // pred_region
          %p330 = scmp.lt.s32.totalorder %s28, 1
          %s331 = scalar_select %p330, %s28, 1
          %s332 = smul.addr %s331, 8
          %s333 = scalar_lea.vmem %s0, %s332
        $region52: #{dagnn_forward.1} parent=47 // pred_fallthru
          _
        // Predicated region
        $region53: #{dagnn_forward.1} parent=47 // pred_check
          %p334 = pneg %p84
        $region54: #{dagnn_forward.1} parent=47 // pred_check_branch
          %336 = sbr.rel (%p334) target = $region56
        $region55: #{dagnn_forward.1} parent=47 // pred_region
          %s337 = sand.u32 %s74, 1
          %s338 = sand.u32 %s74, 1
          %s339 = smul.addr %s338, 128
          %s340 = scalar_lea.vmem [#allocation6], %s339
          %p341 = scmp.lt.s32.totalorder %s27, 1
          %s342 = scalar_select %p341, %s27, 1
          %s343 = smul.u32 %s28, %s342
          %s344 = smul.addr %s343, 4
          %s345 = scalar_lea.vmem %s1, %s344
          // Predicated region
          $region57: #{dagnn_forward.1} parent=55 // pred_check
            _
          $region58: #{dagnn_forward.1} parent=55 // pred_check_branch
            %347 = sbr.rel (0) target = $region60
          $region59: #{dagnn_forward.1} parent=55 // pred_region
            // Predicated region
            $region61: #{dagnn_forward.1} parent=59 // pred_check
              _
            $region62: #{dagnn_forward.1} parent=59 // pred_check_branch
              %349 = sbr.rel target = $region64
            $region63: #{dagnn_forward.1} parent=59 // pred_region
              // Predicated region
              $region76: #{dagnn_forward.1} parent=63 // pred_check
                _
              $region77: #{dagnn_forward.1} parent=63 // pred_check_branch
                %426 = sbr.rel (0) target = $region79
              $region78: #{dagnn_forward.1} parent=63 // pred_region
                loop: start=0, step=1, limit=1
                $region80: #{dagnn_forward.1} parent=78 // loop_pre_header
                  _
                $region81: #{dagnn_forward.1} parent=78 // loop_header
                  %s428 = sphi 0, %s432
                  %p429 = scmp.ge.s32.totalorder %s428, 1
                  %s433 = sphi %s345, %s345
                  %s434 = sphi %s340, %s340
                $region82: #{dagnn_forward.1} parent=78 // loop_header_branch
                  %431 = sbr.rel (%p429) target = $region86
                $region83: #{dagnn_forward.1} parent=78 // loop_body
                  _
                $region84: #{dagnn_forward.1} parent=78 // loop_footer
                  %s432 = sadd.s32 1, %s428
                $region85: #{dagnn_forward.1} parent=78 // loop_footer_branch
                  %427 = sbr.rel target = $region81
                $region86: #{dagnn_forward.1} parent=78 // loop_exit
                  _
                loop: start=0, step=1, limit=1
                $region87: #{dagnn_forward.1} parent=78 // loop_pre_header
                  _
                $region88: #{dagnn_forward.1} parent=78 // loop_header
                  %s437 = sphi 0, %s441
                  %p438 = scmp.ge.s32.totalorder %s437, 1
                  %s442 = sphi %s345, %s345
                  %s443 = sphi %s340, %s340
                $region89: #{dagnn_forward.1} parent=78 // loop_header_branch
                  %440 = sbr.rel (%p438) target = $region93
                $region90: #{dagnn_forward.1} parent=78 // loop_body
                  %v444 = vld [vmem:[%s442] sm:$0xf]
                  %445 = vst [vmem:[%s443] sm:$0xf] %v444
                  %v446 = vld [vmem:[%s442 + $0x8] sm:$0xf]
                  %447 = vst [vmem:[%s443 + $0x4] sm:$0xf] %v446
                  %v448 = vld [vmem:[%s442 + $0x10] sm:$0xf]
                  %449 = vst [vmem:[%s443 + $0x8] sm:$0xf] %v448
                  %v450 = vld [vmem:[%s442 + $0x18] sm:$0xf]
                  %451 = vst [vmem:[%s443 + $0xc] sm:$0xf] %v450
                  %v452 = vld [vmem:[%s442 + $0x20] sm:$0xf]
                  %453 = vst [vmem:[%s443 + $0x10] sm:$0xf] %v452
                  %v454 = vld [vmem:[%s442 + $0x28] sm:$0xf]
                  %455 = vst [vmem:[%s443 + $0x14] sm:$0xf] %v454
                  %v456 = vld [vmem:[%s442 + $0x30] sm:$0xf]
                  %457 = vst [vmem:[%s443 + $0x18] sm:$0xf] %v456
                  %v458 = vld [vmem:[%s442 + $0x38] sm:$0xf]
                  %459 = vst [vmem:[%s443 + $0x1c] sm:$0xf] %v458
                  %v460 = vld [vmem:[%s442 + $0x40] sm:$0xf]
                  %461 = vst [vmem:[%s443 + $0x20] sm:$0xf] %v460
                  %v462 = vld [vmem:[%s442 + $0x48] sm:$0xf]
                  %463 = vst [vmem:[%s443 + $0x24] sm:$0xf] %v462
                  %v464 = vld [vmem:[%s442 + $0x50] sm:$0xf]
                  %465 = vst [vmem:[%s443 + $0x28] sm:$0xf] %v464
                  %v466 = vld [vmem:[%s442 + $0x58] sm:$0xf]
                  %467 = vst [vmem:[%s443 + $0x2c] sm:$0xf] %v466
                  %v468 = vld [vmem:[%s442 + $0x60] sm:$0xf]
                  %469 = vst [vmem:[%s443 + $0x30] sm:$0xf] %v468
                  %v470 = vld [vmem:[%s442 + $0x68] sm:$0xf]
                  %471 = vst [vmem:[%s443 + $0x34] sm:$0xf] %v470
                  %v472 = vld [vmem:[%s442 + $0x70] sm:$0xf]
                  %473 = vst [vmem:[%s443 + $0x38] sm:$0xf] %v472
                  %v474 = vld [vmem:[%s442 + $0x78] sm:$0xf]
                  %475 = vst [vmem:[%s443 + $0x3c] sm:$0xf] %v474
                  %v476 = vld [vmem:[%s442 + $0x80] sm:$0xf]
                  %477 = vst [vmem:[%s443 + $0x40] sm:$0xf] %v476
                  %v478 = vld [vmem:[%s442 + $0x88] sm:$0xf]
                  %479 = vst [vmem:[%s443 + $0x44] sm:$0xf] %v478
                  %v480 = vld [vmem:[%s442 + $0x90] sm:$0xf]
                  %481 = vst [vmem:[%s443 + $0x48] sm:$0xf] %v480
                  %v482 = vld [vmem:[%s442 + $0x98] sm:$0xf]
                  %483 = vst [vmem:[%s443 + $0x4c] sm:$0xf] %v482
                  %v484 = vld [vmem:[%s442 + $0xa0] sm:$0xf]
                  %485 = vst [vmem:[%s443 + $0x50] sm:$0xf] %v484
                  %v486 = vld [vmem:[%s442 + $0xa8] sm:$0xf]
                  %487 = vst [vmem:[%s443 + $0x54] sm:$0xf] %v486
                  %v488 = vld [vmem:[%s442 + $0xb0] sm:$0xf]
                  %489 = vst [vmem:[%s443 + $0x58] sm:$0xf] %v488
                  %v490 = vld [vmem:[%s442 + $0xb8] sm:$0xf]
                  %491 = vst [vmem:[%s443 + $0x5c] sm:$0xf] %v490
                  %v492 = vld [vmem:[%s442 + $0xc0] sm:$0xf]
                  %493 = vst [vmem:[%s443 + $0x60] sm:$0xf] %v492
                  %v494 = vld [vmem:[%s442 + $0xc8] sm:$0xf]
                  %495 = vst [vmem:[%s443 + $0x64] sm:$0xf] %v494
                  %v496 = vld [vmem:[%s442 + $0xd0] sm:$0xf]
                  %497 = vst [vmem:[%s443 + $0x68] sm:$0xf] %v496
                  %v498 = vld [vmem:[%s442 + $0xd8] sm:$0xf]
                  %499 = vst [vmem:[%s443 + $0x6c] sm:$0xf] %v498
                  %v500 = vld [vmem:[%s442 + $0xe0] sm:$0xf]
                  %501 = vst [vmem:[%s443 + $0x70] sm:$0xf] %v500
                  %v502 = vld [vmem:[%s442 + $0xe8] sm:$0xf]
                  %503 = vst [vmem:[%s443 + $0x74] sm:$0xf] %v502
                  %v504 = vld [vmem:[%s442 + $0xf0] sm:$0xf]
                  %505 = vst [vmem:[%s443 + $0x78] sm:$0xf] %v504
                  %v506 = vld [vmem:[%s442 + $0xf8] sm:$0xf]
                  %507 = vst [vmem:[%s443 + $0x7c] sm:$0xf] %v506
                $region91: #{dagnn_forward.1} parent=78 // loop_footer
                  %s441 = sadd.s32 1, %s437
                $region92: #{dagnn_forward.1} parent=78 // loop_footer_branch
                  %436 = sbr.rel target = $region88
                $region93: #{dagnn_forward.1} parent=78 // loop_exit
                  _
              $region79: #{dagnn_forward.1} parent=63 // pred_fallthru
                _
            $region64: #{dagnn_forward.1} parent=59 // pred_fallthru
              _
            // Predicated region
            $region65: #{dagnn_forward.1} parent=59 // pred_check
              _
            $region66: #{dagnn_forward.1} parent=59 // pred_check_branch
              %351 = sbr.rel (0) target = $region68
            $region67: #{dagnn_forward.1} parent=59 // pred_region
              loop: start=0, step=1, limit=1
              $region69: #{dagnn_forward.1} parent=67 // loop_pre_header
                _
              $region70: #{dagnn_forward.1} parent=67 // loop_header
                %s354 = sphi 0, %s358
                %p355 = scmp.ge.s32.totalorder %s354, 1
                %s359 = sphi %s345, %s345
                %s360 = sphi %s340, %s340
              $region71: #{dagnn_forward.1} parent=67 // loop_header_branch
                %357 = sbr.rel (%p355) target = $region75
              $region72: #{dagnn_forward.1} parent=67 // loop_body
                %v361 = vld [vmem:[%s359] sm:$0xf]
                %362 = vst [vmem:[%s360] sm:$0xf] %v361
                %v363 = vld [vmem:[%s359 + $0x8] sm:$0xf]
                %364 = vst [vmem:[%s360 + $0x4] sm:$0xf] %v363
                %v365 = vld [vmem:[%s359 + $0x10] sm:$0xf]
                %366 = vst [vmem:[%s360 + $0x8] sm:$0xf] %v365
                %v367 = vld [vmem:[%s359 + $0x18] sm:$0xf]
                %368 = vst [vmem:[%s360 + $0xc] sm:$0xf] %v367
                %v369 = vld [vmem:[%s359 + $0x20] sm:$0xf]
                %370 = vst [vmem:[%s360 + $0x10] sm:$0xf] %v369
                %v371 = vld [vmem:[%s359 + $0x28] sm:$0xf]
                %372 = vst [vmem:[%s360 + $0x14] sm:$0xf] %v371
                %v373 = vld [vmem:[%s359 + $0x30] sm:$0xf]
                %374 = vst [vmem:[%s360 + $0x18] sm:$0xf] %v373
                %v375 = vld [vmem:[%s359 + $0x38] sm:$0xf]
                %376 = vst [vmem:[%s360 + $0x1c] sm:$0xf] %v375
                %v377 = vld [vmem:[%s359 + $0x40] sm:$0xf]
                %378 = vst [vmem:[%s360 + $0x20] sm:$0xf] %v377
                %v379 = vld [vmem:[%s359 + $0x48] sm:$0xf]
                %380 = vst [vmem:[%s360 + $0x24] sm:$0xf] %v379
                %v381 = vld [vmem:[%s359 + $0x50] sm:$0xf]
                %382 = vst [vmem:[%s360 + $0x28] sm:$0xf] %v381
                %v383 = vld [vmem:[%s359 + $0x58] sm:$0xf]
                %384 = vst [vmem:[%s360 + $0x2c] sm:$0xf] %v383
                %v385 = vld [vmem:[%s359 + $0x60] sm:$0xf]
                %386 = vst [vmem:[%s360 + $0x30] sm:$0xf] %v385
                %v387 = vld [vmem:[%s359 + $0x68] sm:$0xf]
                %388 = vst [vmem:[%s360 + $0x34] sm:$0xf] %v387
                %v389 = vld [vmem:[%s359 + $0x70] sm:$0xf]
                %390 = vst [vmem:[%s360 + $0x38] sm:$0xf] %v389
                %v391 = vld [vmem:[%s359 + $0x78] sm:$0xf]
                %392 = vst [vmem:[%s360 + $0x3c] sm:$0xf] %v391
                %v393 = vld [vmem:[%s359 + $0x80] sm:$0xf]
                %394 = vst [vmem:[%s360 + $0x40] sm:$0xf] %v393
                %v395 = vld [vmem:[%s359 + $0x88] sm:$0xf]
                %396 = vst [vmem:[%s360 + $0x44] sm:$0xf] %v395
                %v397 = vld [vmem:[%s359 + $0x90] sm:$0xf]
                %398 = vst [vmem:[%s360 + $0x48] sm:$0xf] %v397
                %v399 = vld [vmem:[%s359 + $0x98] sm:$0xf]
                %400 = vst [vmem:[%s360 + $0x4c] sm:$0xf] %v399
                %v401 = vld [vmem:[%s359 + $0xa0] sm:$0xf]
                %402 = vst [vmem:[%s360 + $0x50] sm:$0xf] %v401
                %v403 = vld [vmem:[%s359 + $0xa8] sm:$0xf]
                %404 = vst [vmem:[%s360 + $0x54] sm:$0xf] %v403
                %v405 = vld [vmem:[%s359 + $0xb0] sm:$0xf]
                %406 = vst [vmem:[%s360 + $0x58] sm:$0xf] %v405
                %v407 = vld [vmem:[%s359 + $0xb8] sm:$0xf]
                %408 = vst [vmem:[%s360 + $0x5c] sm:$0xf] %v407
                %v409 = vld [vmem:[%s359 + $0xc0] sm:$0xf]
                %410 = vst [vmem:[%s360 + $0x60] sm:$0xf] %v409
                %v411 = vld [vmem:[%s359 + $0xc8] sm:$0xf]
                %412 = vst [vmem:[%s360 + $0x64] sm:$0xf] %v411
                %v413 = vld [vmem:[%s359 + $0xd0] sm:$0xf]
                %414 = vst [vmem:[%s360 + $0x68] sm:$0xf] %v413
                %v415 = vld [vmem:[%s359 + $0xd8] sm:$0xf]
                %416 = vst [vmem:[%s360 + $0x6c] sm:$0xf] %v415
                %v417 = vld [vmem:[%s359 + $0xe0] sm:$0xf]
                %418 = vst [vmem:[%s360 + $0x70] sm:$0xf] %v417
                %v419 = vld [vmem:[%s359 + $0xe8] sm:$0xf]
                %420 = vst [vmem:[%s360 + $0x74] sm:$0xf] %v419
                %v421 = vld [vmem:[%s359 + $0xf0] sm:$0xf]
                %422 = vst [vmem:[%s360 + $0x78] sm:$0xf] %v421
                %v423 = vld [vmem:[%s359 + $0xf8] sm:$0xf]
                %424 = vst [vmem:[%s360 + $0x7c] sm:$0xf] %v423
              $region73: #{dagnn_forward.1} parent=67 // loop_footer
                %s358 = sadd.s32 1, %s354
              $region74: #{dagnn_forward.1} parent=67 // loop_footer_branch
                %353 = sbr.rel target = $region70
              $region75: #{dagnn_forward.1} parent=67 // loop_exit
                _
            $region68: #{dagnn_forward.1} parent=59 // pred_fallthru
              _
          $region60: #{dagnn_forward.1} parent=55 // pred_fallthru
            _
          %508 = vnop
        $region56: #{dagnn_forward.1} parent=47 // pred_fallthru
          _
      $region48: #{dagnn_forward.1} parent=5 // pred_fallthru
        _
      %p509 = scmp.le.s32.totalorder 1, %s20
      %p510 = scmp.lt.s32.totalorder %s20, 11
      %p511 = pnand %p509, %p510
      %p512 = pneg %p511
      // Predicated region
      $region94: #{dagnn_forward.1} parent=5 // pred_check
        _
      $region95: #{dagnn_forward.1} parent=5 // pred_check_branch
        %514 = sbr.rel (%p511) target = $region97
      $region96: #{dagnn_forward.1} parent=5 // pred_region
        %s515 = ssub.s32 %s20, 1
        %s516 = sand.u32 %s77, 1
        %s517 = sand.u32 %s77, 1
        %s518 = smul.addr %s517, 128
        %s519 = scalar_lea.vmem [#allocation6], %s518
        // Predicated region
        $region98: #{dagnn_forward.1} parent=96 // pred_check
          %p520 = pneg %p90
        $region99: #{dagnn_forward.1} parent=96 // pred_check_branch
          %522 = sbr.rel (%p520) target = $region101
        $region100: #{dagnn_forward.1} parent=96 // pred_region
          _
        $region101: #{dagnn_forward.1} parent=96 // pred_fallthru
          _
        %p523 = scmp.lt.s32.totalorder %s30, 1
        %s524 = scalar_select %p523, %s30, 1
        %s525 = smul.addr %s524, 8
        %s526 = scalar_lea.vmem %s0, %s525
        %p527 = pneg %p58
        %p528 = pneg %p55
        %s529 = sand.u32 %s77, 1
        %s530 = sand.u32 %s77, 1
        %s531 = smul.addr %s530, 128
        %s532 = scalar_lea.vmem [#allocation6], %s531
        %p533 = pneg %p90
        %p534 = pneg %p87
        %p535 = pneg %p111
        %p536 = pneg %p108
        %p537 = pneg %p132
        %p538 = pneg %p129
        %p539 = pneg %p153
        %p540 = pneg %p150
        %p541 = pneg %p174
        %p542 = pneg %p171
        %p543 = pneg %p195
        %p544 = pneg %p192
        %p545 = pneg %p216
        %p546 = pneg %p213
        %p547 = pneg %p237
        %p548 = pneg %p234
        %p549 = pneg %p258
        %p550 = pneg %p255
        %p551 = pneg %p284
        %p552 = pneg %p281
        %s553 = sand.u32 %s271, 1
        %s554 = scalar_lea.sflag [#allocation8], %s553
        %s555 = sand.u32 %s271, 1
        %s556 = smul.addr %s555, 4
        %s557 = scalar_lea.vmem [#allocation7], %s556
        %p558 = scmp.lt.s32.totalorder %s30, 1
        %s559 = scalar_select %p558, %s30, 1
        %s560 = smul.addr %s559, 8
        %s561 = scalar_lea.vmem %s0, %s560
        %p562 = scmp.lt.s32.totalorder %s29, 1
        %s563 = scalar_select %p562, %s29, 1
        %s564 = smul.u32 %s30, %s563
        %s566 = smul.u32 %s30, 128
        %v567 = vld [vmem:[%s8] sm:$0xf]
        %s568 = sld [smem:[#allocation5]]
        %p569 = scmp.eq.s32.totalorder %s29, 0
        // Predicated region
        $region102: #{dagnn_forward.1} parent=96 // pred_check
          %p570 = pneg %p569
        $region103: #{dagnn_forward.1} parent=96 // pred_check_branch
          %572 = sbr.rel (%p570) target = $region105
        $region104: #{dagnn_forward.1} parent=96 // pred_region
          %v573 = vld [vmem:[%s2] sm:$0xff]
          %v574 = vld [vmem:[%s2 + $0x8] sm:$0xff]
          %v575 = vld [vmem:[%s2 + $0x10] sm:$0xff]
          %v576 = vld [vmem:[%s2 + $0x18] sm:$0xff]
          %v577 = vld [vmem:[%s561] sm:$0xff]
          %v578 = vld [vmem:[%s3] sm:$0xff]
          %v579 = vld [vmem:[%s3 + $0x8] sm:$0xff]
          %v580 = vld [vmem:[%s3 + $0x10] sm:$0xff]
          %v581 = vld [vmem:[%s3 + $0x18] sm:$0xff]
          %583 = vset.pattern.permute.xlu0 0
          %584 = vperm.xlu0 %583, %v578
          %v585 = vpop.permute.xlu0 %584
          %588 = vset.pattern.permute.xlu0 0
          %589 = vperm.xlu0 %588, %v579
          %v590 = vpop.permute.xlu0 %589
          %593 = vset.pattern.permute.xlu0 0
          %594 = vperm.xlu0 %593, %v580
          %v595 = vpop.permute.xlu0 %594
          %598 = vset.pattern.permute.xlu0 0
          %599 = vperm.xlu0 %598, %v581
          %v600 = vpop.permute.xlu0 %599
          %vm602 = vcmask 64512
          %v604 = vsel %vm602, %v573, 0
          %v607 = vsel %vm602, %v574, 0
          %v610 = vsel %vm602, %v575, 0
          %v613 = vsel %vm602, %v576, 0
          %615 = vmatprep.subr.mxu0 0.0
          %616 = vmatpush1.msra.mxu0 %v577
          %617 = vmatprep.subr.mxu0 0.0
          %618 = vmatpush1.msra.mxu0 0.0
          %619 = vmatprep.subr.mxu0 0.0
          %620 = vmatpush1.msra.mxu0 0.0
          %621 = vmatprep.subr.mxu0 0.0
          %622 = vmatpush1.msra.mxu0 0.0
          %623 = vmatprep.subr.mxu0 0.0
          %624 = vmatpush1.msra.mxu0 0.0
          %625 = vmatprep.subr.mxu0 0.0
          %626 = vmatpush1.msra.mxu0 0.0
          %627 = vmatprep.subr.mxu0 0.0
          %628 = vmatpush1.msra.mxu0 0.0
          %629 = vmatprep.subr.mxu0 0.0
          %630 = vmatpush1.msra.mxu0 0.0
          %631 = vmatprep.subr.mxu0 0.0
          %632 = vmatpush1.msra.mxu0 0.0
          %633 = vmatprep.subr.mxu0 0.0
          %634 = vmatpush1.msra.mxu0 0.0
          %635 = vmatprep.subr.mxu0 0.0
          %636 = vmatpush1.msra.mxu0 0.0
          %637 = vmatprep.subr.mxu0 0.0
          %638 = vmatpush1.msra.mxu0 0.0
          %639 = vmatprep.subr.mxu0 0.0
          %640 = vmatpush1.msra.mxu0 0.0
          %641 = vmatprep.subr.mxu0 0.0
          %642 = vmatpush1.msra.mxu0 0.0
          %643 = vmatprep.subr.mxu0 0.0
          %644 = vmatpush1.msra.mxu0 0.0
          %645 = vmatprep.subr.mxu0 0.0
          %646 = vmatpush1.msra.mxu0 0.0
          %647 = vmatprep.subr.mxu0 0.0
          %648 = vmatpush1.msra.mxu0 0.0
          %649 = vmatprep.subr.mxu0 0.0
          %650 = vmatpush1.msra.mxu0 0.0
          %651 = vmatprep.subr.mxu0 0.0
          %652 = vmatpush1.msra.mxu0 0.0
          %653 = vmatprep.subr.mxu0 0.0
          %654 = vmatpush1.msra.mxu0 0.0
          %655 = vmatprep.subr.mxu0 0.0
          %656 = vmatpush1.msra.mxu0 0.0
          %657 = vmatprep.subr.mxu0 0.0
          %658 = vmatpush1.msra.mxu0 0.0
          %659 = vmatprep.subr.mxu0 0.0
          %660 = vmatpush1.msra.mxu0 0.0
          %661 = vmatprep.subr.mxu0 0.0
          %662 = vmatpush1.msra.mxu0 0.0
          %663 = vmatprep.subr.mxu0 0.0
          %664 = vmatpush1.msra.mxu0 0.0
          %665 = vmatprep.subr.mxu0 0.0
          %666 = vmatpush1.msra.mxu0 0.0
          %667 = vmatprep.subr.mxu0 0.0
          %668 = vmatpush1.msra.mxu0 0.0
          %669 = vmatprep.subr.mxu0 0.0
          %670 = vmatpush1.msra.mxu0 0.0
          %671 = vmatprep.subr.mxu0 0.0
          %672 = vmatpush1.msra.mxu0 0.0
          %673 = vmatprep.subr.mxu0 0.0
          %674 = vmatpush1.msra.mxu0 0.0
          %675 = vmatprep.subr.mxu0 0.0
          %676 = vmatpush1.msra.mxu0 0.0
          %677 = vmatprep.subr.mxu0 0.0
          %678 = vmatpush1.msra.mxu0 0.0
          %679 = vmatprep.mubr.f32.mxu0 0.0
          %680 = vmatmul.mubr.f32.gmra.mrb[0].mxu0 %v604
          %v681 = vpop.f32.mrb[0].mxu0
          %v682 = vadd.f32 %v585, %v681
          %v683 = vpop.f32.mrb[0].mxu0
          %684 = vmatprep.mubr.f32.mxu0 0.0
          %685 = vmatmul.mubr.f32.gmra.mrb[0].mxu0 %v607
          %v686 = vpop.f32.mrb[0].mxu0
          %v687 = vadd.f32 %v590, %v686
          %v688 = vpop.f32.mrb[0].mxu0
          %689 = vmatprep.mubr.f32.mxu0 0.0
          %690 = vmatmul.mubr.f32.gmra.mrb[0].mxu0 %v610
          %v691 = vpop.f32.mrb[0].mxu0
          %v692 = vadd.f32 %v595, %v691
          %v693 = vpop.f32.mrb[0].mxu0
          %694 = vmatprep.mubr.f32.mxu0 0.0
          %695 = vmatmul.mubr.f32.gmra.mrb[0].mxu0 %v613
          %v696 = vpop.f32.mrb[0].mxu0
          %v697 = vadd.f32 %v600, %v696
          %v698 = vpop.f32.mrb[0].mxu0
          %699 = vdwg.mxu0
          %v700 = vmax.f32 %v682, 0.0
          %v701 = vmax.f32 %v687, 0.0
          %v702 = vmax.f32 %v692, 0.0
          %v703 = vmax.f32 %v697, 0.0
          %v704 = vld [vmem:[%s4] sm:$0xff]
          %v705 = vld [vmem:[%s4 + $0x8] sm:$0xff]
          %v706 = vld [vmem:[%s4 + $0x10] sm:$0xff]
          %v707 = vld [vmem:[%s4 + $0x18] sm:$0xff]
          %v708 = vld [vmem:[%s5] sm:$0xff]
          %v709 = vld [vmem:[%s5 + $0x8] sm:$0xff]
          %v710 = vld [vmem:[%s5 + $0x10] sm:$0xff]
          %v711 = vld [vmem:[%s5 + $0x18] sm:$0xff]
          %713 = vset.pattern.permute.xlu0 0
          %714 = vperm.xlu0 %713, %v708
          %v715 = vpop.permute.xlu0 %714
          %718 = vset.pattern.permute.xlu0 0
          %719 = vperm.xlu0 %718, %v709
          %v720 = vpop.permute.xlu0 %719
          %723 = vset.pattern.permute.xlu0 0
          %724 = vperm.xlu0 %723, %v710
          %v725 = vpop.permute.xlu0 %724
          %728 = vset.pattern.permute.xlu0 0
          %729 = vperm.xlu0 %728, %v711
          %v730 = vpop.permute.xlu0 %729
          %vm732 = vcmask 261120
          %v734 = vsel %vm732, %v704, 0
          %v737 = vsel %vm732, %v705, 0
          %v740 = vsel %vm732, %v706, 0
          %v743 = vsel %vm732, %v707, 0
          %745 = vmatprep.subr.mxu0 0.0
          %746 = vmatpush1.msra.mxu0 %v700
          %747 = vmatprep.subr.mxu0 0.0
          %748 = vmatpush1.msra.mxu0 %v701
          %749 = vmatprep.subr.mxu0 0.0
          %750 = vmatpush1.msra.mxu0 %v702
          %751 = vmatprep.subr.mxu0 0.0
          %752 = vmatpush1.msra.mxu0 %v703
          %753 = vmatprep.subr.mxu0 0.0
          %754 = vmatpush1.msra.mxu0 0.0
          %755 = vmatprep.subr.mxu0 0.0
          %756 = vmatpush1.msra.mxu0 0.0
          %757 = vmatprep.subr.mxu0 0.0
          %758 = vmatpush1.msra.mxu0 0.0
          %759 = vmatprep.subr.mxu0 0.0
          %760 = vmatpush1.msra.mxu0 0.0
          %761 = vmatprep.subr.mxu0 0.0
          %762 = vmatpush1.msra.mxu0 0.0
          %763 = vmatprep.subr.mxu0 0.0
          %764 = vmatpush1.msra.mxu0 0.0
          %765 = vmatprep.subr.mxu0 0.0
          %766 = vmatpush1.msra.mxu0 0.0
          %767 = vmatprep.subr.mxu0 0.0
          %768 = vmatpush1.msra.mxu0 0.0
          %769 = vmatprep.subr.mxu0 0.0
          %770 = vmatpush1.msra.mxu0 0.0
          %771 = vmatprep.subr.mxu0 0.0
          %772 = vmatpush1.msra.mxu0 0.0
          %773 = vmatprep.subr.mxu0 0.0
          %774 = vmatpush1.msra.mxu0 0.0
          %775 = vmatprep.subr.mxu0 0.0
          %776 = vmatpush1.msra.mxu0 0.0
          %777 = vmatprep.subr.mxu0 0.0
          %778 = vmatpush1.msra.mxu0 0.0
          %779 = vmatprep.subr.mxu0 0.0
          %780 = vmatpush1.msra.mxu0 0.0
          %781 = vmatprep.subr.mxu0 0.0
          %782 = vmatpush1.msra.mxu0 0.0
          %783 = vmatprep.subr.mxu0 0.0
          %784 = vmatpush1.msra.mxu0 0.0
          %785 = vmatprep.subr.mxu0 0.0
          %786 = vmatpush1.msra.mxu0 0.0
          %787 = vmatprep.subr.mxu0 0.0
          %788 = vmatpush1.msra.mxu0 0.0
          %789 = vmatprep.subr.mxu0 0.0
          %790 = vmatpush1.msra.mxu0 0.0
          %791 = vmatprep.subr.mxu0 0.0
          %792 = vmatpush1.msra.mxu0 0.0
          %793 = vmatprep.subr.mxu0 0.0
          %794 = vmatpush1.msra.mxu0 0.0
          %795 = vmatprep.subr.mxu0 0.0
          %796 = vmatpush1.msra.mxu0 0.0
          %797 = vmatprep.subr.mxu0 0.0
          %798 = vmatpush1.msra.mxu0 0.0
          %799 = vmatprep.subr.mxu0 0.0
          %800 = vmatpush1.msra.mxu0 0.0
          %801 = vmatprep.subr.mxu0 0.0
          %802 = vmatpush1.msra.mxu0 0.0
          %803 = vmatprep.subr.mxu0 0.0
          %804 = vmatpush1.msra.mxu0 0.0
          %805 = vmatprep.subr.mxu0 0.0
          %806 = vmatpush1.msra.mxu0 0.0
          %807 = vmatprep.subr.mxu0 0.0
          %808 = vmatpush1.msra.mxu0 0.0
          %809 = vmatprep.mubr.f32.mxu0 0.0
          %810 = vmatmul.mubr.f32.gmra.mrb[0].mxu0 %v734
          %v811 = vpop.f32.mrb[0].mxu0
          %v812 = vadd.f32 %v715, %v811
          %v813 = vpop.f32.mrb[0].mxu0
          %814 = vmatprep.mubr.f32.mxu0 0.0
          %815 = vmatmul.mubr.f32.gmra.mrb[0].mxu0 %v737
          %v816 = vpop.f32.mrb[0].mxu0
          %v817 = vadd.f32 %v720, %v816
          %v818 = vpop.f32.mrb[0].mxu0
          %819 = vmatprep.mubr.f32.mxu0 0.0
          %820 = vmatmul.mubr.f32.gmra.mrb[0].mxu0 %v740
          %v821 = vpop.f32.mrb[0].mxu0
          %v822 = vadd.f32 %v725, %v821
          %v823 = vpop.f32.mrb[0].mxu0
          %824 = vmatprep.mubr.f32.mxu0 0.0
          %825 = vmatmul.mubr.f32.gmra.mrb[0].mxu0 %v743
          %v826 = vpop.f32.mrb[0].mxu0
          %v827 = vadd.f32 %v730, %v826
          %v828 = vpop.f32.mrb[0].mxu0
          %829 = vdwg.mxu0
          %v830 = vmax.f32 %v812, 0.0
          %v831 = vmax.f32 %v817, 0.0
          %v832 = vmax.f32 %v822, 0.0
          %v833 = vmax.f32 %v827, 0.0
          %v834 = vld [vmem:[%s6] sm:$0xf]
          %v835 = vld [vmem:[%s7] sm:$0xf]
          %837 = vset.pattern.permute.xlu0 0
          %838 = vperm.xlu0 %837, %v835
          %v839 = vpop.permute.xlu0 %838
          %v842 = vsel %vm732, %v834, 0
          %844 = vmatprep.subr.mxu0 0.0
          %845 = vmatpush1.msra.mxu0 %v830
          %846 = vmatprep.subr.mxu0 0.0
          %847 = vmatpush1.msra.mxu0 %v831
          %848 = vmatprep.subr.mxu0 0.0
          %849 = vmatpush1.msra.mxu0 %v832
          %850 = vmatprep.subr.mxu0 0.0
          %851 = vmatpush1.msra.mxu0 %v833
          %852 = vmatprep.subr.mxu0 0.0
          %853 = vmatpush1.msra.mxu0 0.0
          %854 = vmatprep.subr.mxu0 0.0
          %855 = vmatpush1.msra.mxu0 0.0
          %856 = vmatprep.subr.mxu0 0.0
          %857 = vmatpush1.msra.mxu0 0.0
          %858 = vmatprep.subr.mxu0 0.0
          %859 = vmatpush1.msra.mxu0 0.0
          %860 = vmatprep.subr.mxu0 0.0
          %861 = vmatpush1.msra.mxu0 0.0
          %862 = vmatprep.subr.mxu0 0.0
          %863 = vmatpush1.msra.mxu0 0.0
          %864 = vmatprep.subr.mxu0 0.0
          %865 = vmatpush1.msra.mxu0 0.0
          %866 = vmatprep.subr.mxu0 0.0
          %867 = vmatpush1.msra.mxu0 0.0
          %868 = vmatprep.subr.mxu0 0.0
          %869 = vmatpush1.msra.mxu0 0.0
          %870 = vmatprep.subr.mxu0 0.0
          %871 = vmatpush1.msra.mxu0 0.0
          %872 = vmatprep.subr.mxu0 0.0
          %873 = vmatpush1.msra.mxu0 0.0
          %874 = vmatprep.subr.mxu0 0.0
          %875 = vmatpush1.msra.mxu0 0.0
          %876 = vmatprep.subr.mxu0 0.0
          %877 = vmatpush1.msra.mxu0 0.0
          %878 = vmatprep.subr.mxu0 0.0
          %879 = vmatpush1.msra.mxu0 0.0
          %880 = vmatprep.subr.mxu0 0.0
          %881 = vmatpush1.msra.mxu0 0.0
          %882 = vmatprep.subr.mxu0 0.0
          %883 = vmatpush1.msra.mxu0 0.0
          %884 = vmatprep.subr.mxu0 0.0
          %885 = vmatpush1.msra.mxu0 0.0
          %886 = vmatprep.subr.mxu0 0.0
          %887 = vmatpush1.msra.mxu0 0.0
          %888 = vmatprep.subr.mxu0 0.0
          %889 = vmatpush1.msra.mxu0 0.0
          %890 = vmatprep.subr.mxu0 0.0
          %891 = vmatpush1.msra.mxu0 0.0
          %892 = vmatprep.subr.mxu0 0.0
          %893 = vmatpush1.msra.mxu0 0.0
          %894 = vmatprep.subr.mxu0 0.0
          %895 = vmatpush1.msra.mxu0 0.0
          %896 = vmatprep.subr.mxu0 0.0
          %897 = vmatpush1.msra.mxu0 0.0
          %898 = vmatprep.subr.mxu0 0.0
          %899 = vmatpush1.msra.mxu0 0.0
          %900 = vmatprep.subr.mxu0 0.0
          %901 = vmatpush1.msra.mxu0 0.0
          %902 = vmatprep.subr.mxu0 0.0
          %903 = vmatpush1.msra.mxu0 0.0
          %904 = vmatprep.subr.mxu0 0.0
          %905 = vmatpush1.msra.mxu0 0.0
          %906 = vmatprep.subr.mxu0 0.0
          %907 = vmatpush1.msra.mxu0 0.0
          %908 = vmatprep.mubr.f32.mxu0 0.0
          %909 = vmatmul.mubr.f32.gmra.mrb[0].mxu0 %v842
          %v910 = vpop.f32.mrb[0].mxu0
          %v911 = vadd.f32 %v839, %v910
          %v912 = vpop.f32.mrb[0].mxu0
          %913 = vdwg.mxu0
          %v914 = vmax.f32 %v911, 0.0
          %s915 = sshra.s32 %s566, 7
          %s916 = sand.u32 %s566, 127
          %s917 = smul.addr %s915, 4
          %s918 = scalar_lea.vmem [#allocation3], %s917
          %919 = vst [vmem:[%s918] sm:$0xf] %v914
          %921 = vset.pattern.permute.xlu0 0
          %922 = vperm.xlu0 %921, %v567
          %v923 = vpop.permute.xlu0 %922
          %v925 = vmul.f32 %v914, %v923
          %vm926 = vcmask 1043456
          %v927 = vsel %vm926, %v925, 0.0
          %v928 = vrot.slane %v927, 4
          %v929 = vadd.f32 %v927, %v928
          %v930 = vrot.slane %v929, 2
          %v931 = vadd.f32 %v929, %v930
          %v932 = vrot.slane %v931, 1
          %v933 = vadd.f32 %v931, %v932
          %v934 = vstv %s568
          %v935 = vadd.f32 %v933, %v934
          %v936 = vxor.u32 %v935, 2147483648
          %v937 = vmul.f32 %v936, 1.442695
          %v938 = vpow.pop %v937
          %v939 = vadd.f32 %v938, 1.0
          %v940 = vrcp.pop %v939
          %v941 = vmul.f32 1.0, %v940
          %v942 = vmul.f32 %v941, %v914
          %s943 = smul.addr %s915, 4
          %s944 = scalar_lea.vmem [#allocation4], %s943
          %945 = vst [vmem:[%s944] sm:$0xf] %v942
        $region105: #{dagnn_forward.1} parent=96 // pred_fallthru
          _
        %p946 = scmp.gt.s32.totalorder %s29, 0
        // Predicated region
        $region106: #{dagnn_forward.1} parent=96 // pred_check
          %p947 = pneg %p946
        $region107: #{dagnn_forward.1} parent=96 // pred_check_branch
          %949 = sbr.rel (%p947) target = $region109
        $region108: #{dagnn_forward.1} parent=96 // pred_region
          %v950 = vld [vmem:[#allocation2] sm:$0xff]
          %v952 = vcombine.high %v950, %v950
          %v954 = vpack.c.bf16 %v950, %v950
          %v955 = vpack.c.bf16 %v952, %v952
          %v956 = vld [vmem:[%s519] sm:$0xf]
          %v957 = vld [vmem:[%s519 + $0x4] sm:$0xf]
          %v958 = vld [vmem:[%s519 + $0x8] sm:$0xf]
          %v959 = vld [vmem:[%s519 + $0xc] sm:$0xf]
          %v960 = vld [vmem:[%s519 + $0x10] sm:$0xf]
          %v961 = vld [vmem:[%s519 + $0x14] sm:$0xf]
          %v962 = vld [vmem:[%s519 + $0x18] sm:$0xf]
          %v963 = vld [vmem:[%s519 + $0x1c] sm:$0xf]
          %v964 = vld [vmem:[%s519 + $0x20] sm:$0xf]
          %v965 = vld [vmem:[%s519 + $0x24] sm:$0xf]
          %v966 = vld [vmem:[%s519 + $0x28] sm:$0xf]
          %v967 = vld [vmem:[%s519 + $0x2c] sm:$0xf]
          %v968 = vld [vmem:[%s519 + $0x30] sm:$0xf]
          %v969 = vld [vmem:[%s519 + $0x34] sm:$0xf]
          %v970 = vld [vmem:[%s519 + $0x38] sm:$0xf]
          %v971 = vld [vmem:[%s519 + $0x3c] sm:$0xf]
          %v972 = vld [vmem:[%s519 + $0x40] sm:$0xf]
          %v973 = vld [vmem:[%s519 + $0x44] sm:$0xf]
          %v974 = vld [vmem:[%s519 + $0x48] sm:$0xf]
          %v975 = vld [vmem:[%s519 + $0x4c] sm:$0xf]
          %v976 = vld [vmem:[%s519 + $0x50] sm:$0xf]
          %v977 = vld [vmem:[%s519 + $0x54] sm:$0xf]
          %v978 = vld [vmem:[%s519 + $0x58] sm:$0xf]
          %v979 = vld [vmem:[%s519 + $0x5c] sm:$0xf]
          %v980 = vld [vmem:[%s519 + $0x60] sm:$0xf]
          %v981 = vld [vmem:[%s519 + $0x64] sm:$0xf]
          %v982 = vld [vmem:[%s519 + $0x68] sm:$0xf]
          %v983 = vld [vmem:[%s519 + $0x6c] sm:$0xf]
          %v984 = vld [vmem:[%s519 + $0x70] sm:$0xf]
          %v985 = vld [vmem:[%s519 + $0x74] sm:$0xf]
          %v986 = vld [vmem:[%s519 + $0x78] sm:$0xf]
          %v987 = vld [vmem:[%s519 + $0x7c] sm:$0xf]
          %v1020 = vunpack.c.l.b16 %v956
          %v1021 = vunpack.c.l.b16 %v957
          %v1022 = vunpack.c.l.b16 %v958
          %v1023 = vunpack.c.l.b16 %v959
          %v1024 = vunpack.c.l.b16 %v960
          %v1025 = vunpack.c.l.b16 %v961
          %v1026 = vunpack.c.l.b16 %v962
          %v1027 = vunpack.c.l.b16 %v963
          %v1028 = vunpack.c.l.b16 %v964
          %v1029 = vunpack.c.l.b16 %v965
          %v1030 = vunpack.c.l.b16 %v966
          %v1031 = vunpack.c.l.b16 %v967
          %v1032 = vunpack.c.l.b16 %v968
          %v1033 = vunpack.c.l.b16 %v969
          %v1034 = vunpack.c.l.b16 %v970
          %v1035 = vunpack.c.l.b16 %v971
          %v1036 = vunpack.c.l.b16 %v972
          %v1037 = vunpack.c.l.b16 %v973
          %v1038 = vunpack.c.l.b16 %v974
          %v1039 = vunpack.c.l.b16 %v975
          %v1040 = vunpack.c.l.b16 %v976
          %v1041 = vunpack.c.l.b16 %v977
          %v1042 = vunpack.c.l.b16 %v978
          %v1043 = vunpack.c.l.b16 %v979
          %v1044 = vunpack.c.l.b16 %v980
          %v1045 = vunpack.c.l.b16 %v981
          %v1046 = vunpack.c.l.b16 %v982
          %v1047 = vunpack.c.l.b16 %v983
          %v1048 = vunpack.c.l.b16 %v984
          %v1049 = vunpack.c.l.b16 %v985
          %v1050 = vunpack.c.l.b16 %v986
          %v1051 = vunpack.c.l.b16 %v987
          %v1052 = vpack.c.b16 %v1021, %v1020
          %v1053 = vpack.c.b16 %v1023, %v1022
          %v1054 = vpack.c.b16 %v1025, %v1024
          %v1055 = vpack.c.b16 %v1027, %v1026
          %v1056 = vpack.c.b16 %v1029, %v1028
          %v1057 = vpack.c.b16 %v1031, %v1030
          %v1058 = vpack.c.b16 %v1033, %v1032
          %v1059 = vpack.c.b16 %v1035, %v1034
          %v1060 = vpack.c.b16 %v1037, %v1036
          %v1061 = vpack.c.b16 %v1039, %v1038
          %v1062 = vpack.c.b16 %v1041, %v1040
          %v1063 = vpack.c.b16 %v1043, %v1042
          %v1064 = vpack.c.b16 %v1045, %v1044
          %v1065 = vpack.c.b16 %v1047, %v1046
          %v1066 = vpack.c.b16 %v1049, %v1048
          %v1067 = vpack.c.b16 %v1051, %v1050
          %1084 = vmatprep.subr.bf16.mxu0 0
          %1085 = vmatpush1.bf16.msra.mxu0 %v1052
          %1086 = vmatprep.subr.bf16.mxu0 0
          %1087 = vmatpush1.bf16.msra.mxu0 %v1053
          %1088 = vmatprep.subr.bf16.mxu0 0
          %1089 = vmatpush1.bf16.msra.mxu0 %v1054
          %1090 = vmatprep.subr.bf16.mxu0 0
          %1091 = vmatpush1.bf16.msra.mxu0 %v1055
          %1092 = vmatprep.subr.bf16.mxu0 0
          %1093 = vmatpush1.bf16.msra.mxu0 %v1056
          %1094 = vmatprep.subr.bf16.mxu0 0
          %1095 = vmatpush1.bf16.msra.mxu0 %v1057
          %1096 = vmatprep.subr.bf16.mxu0 0
          %1097 = vmatpush1.bf16.msra.mxu0 %v1058
          %1098 = vmatprep.subr.bf16.mxu0 0
          %1099 = vmatpush1.bf16.msra.mxu0 %v1059
          %1100 = vmatprep.subr.bf16.mxu0 0
          %1101 = vmatpush1.bf16.msra.mxu0 %v1060
          %1102 = vmatprep.subr.bf16.mxu0 0
          %1103 = vmatpush1.bf16.msra.mxu0 %v1061
          %1104 = vmatprep.subr.bf16.mxu0 0
          %1105 = vmatpush1.bf16.msra.mxu0 %v1062
          %1106 = vmatprep.subr.bf16.mxu0 0
          %1107 = vmatpush1.bf16.msra.mxu0 %v1063
          %1108 = vmatprep.subr.bf16.mxu0 0
          %1109 = vmatpush1.bf16.msra.mxu0 %v1064
          %1110 = vmatprep.subr.bf16.mxu0 0
          %1111 = vmatpush1.bf16.msra.mxu0 %v1065
          %1112 = vmatprep.subr.bf16.mxu0 0
          %1113 = vmatpush1.bf16.msra.mxu0 %v1066
          %1114 = vmatprep.subr.bf16.mxu0 0
          %1115 = vmatpush1.bf16.msra.mxu0 %v1067
          %1116 = vmatprep.mubr.bf16.mxu0 %v955
          %1117 = vmatmul.mubr.bf16.gmra.mrb[0].mxu0 %v954
          %v1118 = vpop.f32.mrb[0].mxu0
          %v1119 = vadd.f32 0.0, %v1118
          %v1120 = vpop.f32.mrb[0].mxu0
          %v1121 = vpop.f32.mrb[0].mxu0
          %v1122 = vpop.f32.mrb[0].mxu0
          %1123 = vdwg.mxu0
          %s1124 = sshra.s32 %s566, 7
          %s1125 = sand.u32 %s566, 127
          %s1126 = smul.addr %s1124, 4
          %s1127 = scalar_lea.vmem [#allocation3], %s1126
          %1128 = vst [vmem:[%s1127] sm:$0xf] %v1119
          %s1129 = smul.addr %s1124, 4
          %s1130 = scalar_lea.vmem [#allocation4], %s1129
          %v1131 = vld [vmem:[%s1130] sm:$0xf]
          %1133 = vset.pattern.permute.xlu0 0
          %1134 = vperm.xlu0 %1133, %v567
          %v1135 = vpop.permute.xlu0 %1134
          %v1137 = vmul.f32 %v1119, %v1135
          %vm1138 = vcmask 1043456
          %v1139 = vsel %vm1138, %v1137, 0.0
          %v1140 = vrot.slane %v1139, 4
          %v1141 = vadd.f32 %v1139, %v1140
          %v1142 = vrot.slane %v1141, 2
          %v1143 = vadd.f32 %v1141, %v1142
          %v1144 = vrot.slane %v1143, 1
          %v1145 = vadd.f32 %v1143, %v1144
          %v1146 = vstv %s568
          %v1147 = vadd.f32 %v1145, %v1146
          %v1148 = vxor.u32 %v1147, 2147483648
          %v1149 = vmul.f32 %v1148, 1.442695
          %v1150 = vpow.pop %v1149
          %v1151 = vadd.f32 %v1150, 1.0
          %v1152 = vrcp.pop %v1151
          %v1153 = vmul.f32 1.0, %v1152
          %v1154 = vmul.f32 %v1153, %v1119
          %v1155 = vadd.f32 %v1131, %v1154
          %1156 = vst [vmem:[%s1130] sm:$0xf] %v1155
        $region109: #{dagnn_forward.1} parent=96 // pred_fallthru
          _
        %s1157 = sshra.s32 %s566, 7
        %s1158 = sand.u32 %s566, 127
        %s1159 = smul.addr %s1157, 4
        %s1160 = scalar_lea.vmem [#allocation4], %s1159
        %v1161 = vld [vmem:[%s1160] sm:$0xf]
        %1162 = vst [vmem:[%s557] sm:$0xf] %v1161
        %p1163 = scmp.eq.s32.totalorder %s30, 1
        // Predicated region
        $region110: #{dagnn_forward.1} parent=96 // pred_check
          %p1164 = pneg %p1163
        $region111: #{dagnn_forward.1} parent=96 // pred_check_branch
          %1166 = sbr.rel (%p1164) target = $region113
        $region112: #{dagnn_forward.1} parent=96 // pred_region
          %v1167 = vld [vmem:[#allocation3] sm:$0xff]
          %1168 = vst [vmem:[#allocation2] sm:$0xff] %v1167
        $region113: #{dagnn_forward.1} parent=96 // pred_fallthru
          _
        %s1169 = sand.u32 %s271, 1
        %s1170 = scalar_lea.sflag [#allocation8], %s1169
        %s1171 = sand.u32 %s271, 1
        %s1172 = smul.addr %s1171, 4
        %s1173 = scalar_lea.vmem [#allocation7], %s1172
        // Predicated region
        $region114: #{dagnn_forward.1} parent=96 // pred_check
          %p1174 = pneg %p281
        $region115: #{dagnn_forward.1} parent=96 // pred_check_branch
          %1176 = sbr.rel (%p1174) target = $region117
        $region116: #{dagnn_forward.1} parent=96 // pred_region
          %s1178 = ssub.s32 64, 64
          %1179 = vsyncadd %s1170, %s1178
          %s1180 = smul.addr %s30, 64
          %s1181 = scalar_lea.hbm %s10, %s1180
          %s1183 = sshll.u32 %s1173, 4
          %s1184 = int_to_ptr.vmem [resolvable:$true] %s1183
          %1186 = dma.vmem_to_hbm [thread:$0]  %s1184, 64, %s1181, %s1170
        $region117: #{dagnn_forward.1} parent=96 // pred_fallthru
          _
      $region97: #{dagnn_forward.1} parent=5 // pred_fallthru
        _
      %p1187 = scmp.le.s32.totalorder 2, %s20
      // Predicated region
      $region118: #{dagnn_forward.1} parent=5 // pred_check
        %p1188 = pneg %p1187
      $region119: #{dagnn_forward.1} parent=5 // pred_check_branch
        %1190 = sbr.rel (%p1188) target = $region121
      $region120: #{dagnn_forward.1} parent=5 // pred_region
        %s1191 = ssub.s32 %s20, 2
        // Predicated region
        $region122: #{dagnn_forward.1} parent=120 // pred_check
          %p1192 = pneg %p287
        $region123: #{dagnn_forward.1} parent=120 // pred_check_branch
          %1194 = sbr.rel (%p1192) target = $region125
        $region124: #{dagnn_forward.1} parent=120 // pred_region
          %s1195 = sand.u32 %s272, 1
          %s1196 = scalar_lea.sflag [#allocation8], %s1195
          %s1197 = sand.u32 %s272, 1
          %s1198 = smul.addr %s1197, 4
          %s1199 = scalar_lea.vmem [#allocation7], %s1198
          %1200 = dma.done %s1196, 64
        $region125: #{dagnn_forward.1} parent=120 // pred_fallthru
          _
      $region121: #{dagnn_forward.1} parent=5 // pred_fallthru
        _
    $region6: #{dagnn_forward.1} parent=1 // loop_footer
      %s24 = sadd.s32 1, %s20
    $region7: #{dagnn_forward.1} parent=1 // loop_footer_branch
      %19 = sbr.rel target = $region3
    $region8: #{dagnn_forward.1} parent=1 // loop_exit
      _
    %1201 = vsyncpa [#allocation8], 1
    %s1202 = scalar_lea.sflag [#allocation8], 1
    %1203 = vsyncpa %s1202, 1

</llo_original>
